<compile_context>
chip_gen: v6e
topology: v6e:2x2x1
jax: 0.10.0
libtpu: 0.0.40
codegen_flags: <defaults>
</compile_context>

<pallas_src>
import functools

import jax
import jax.numpy as jnp
from jax.experimental import pallas as pl
from jax.experimental.pallas import tpu as pltpu

STATE_DIM = 3
ACTION_DIM = 2
H1 = 800
H1_PAD = 896   # 7 * 128, lane-dense padding of the 800-wide hidden layer
H2 = 600
H2_PAD = 640   # 5 * 128, lane-dense padding of the 600-wide hidden layer


def _round_up(x, m):
    return -(-x // m) * m


def _tpu_kind():
    try:
        return jax.devices()[0].device_kind.lower()
    except Exception:
        return ""


_KIND = _tpu_kind()
# bf16 VALU exists on v6e / v7x; keep f32 VPU math on v5e and older.
_USE_BF16_VPU = any(t in _KIND for t in ("v6", "v7", "7x"))
_COMPUTE_DTYPE = jnp.bfloat16 if _USE_BF16_VPU else jnp.float32
_IS_MEGACORE = ("7x" in _KIND) or ("v7" in _KIND)   # 2 TensorCores per chip


def actor_kernel(x_ref, w1_ref, b1_ref, w2_ref, b2_ref, w3_ref, b3_ref, o_ref,
                 *, compute_dtype):
    cdt = compute_dtype

    # ---- layer 1: Linear(3, 896[=800 padded]) + ReLU on the VPU.
    # K=3 would waste the MXU; on v6e/v7x this runs in bf16 (half the vregs / passes).
    x = x_ref[...].astype(cdt)                       # (tb, 3)
    w1 = w1_ref[...].astype(cdt)                     # (3, 896)
    b1 = b1_ref[...].astype(cdt)                     # (1, 896)
    h = (x[:, 0:1] * w1[0:1, :]
         + x[:, 1:2] * w1[1:2, :]
         + x[:, 2:3] * w1[2:3, :]
         + b1)
    h = jnp.maximum(h, 0.0).astype(jnp.bfloat16)     # (tb, 896); no-op cast if cdt==bf16

    # ---- layer 2: Linear(896, 640[=600 padded]) + ReLU, bf16 weights, f32 accumulate
    acc = jnp.dot(h, w2_ref[...], preferred_element_type=jnp.float32)   # (tb, 640) f32
    h2 = jnp.maximum(acc.astype(cdt) + b2_ref[...].astype(cdt), 0.0)
    h2 = h2.astype(jnp.bfloat16)                     # (tb, 640); padded cols exactly 0

    # ---- layer 3: Linear(640[=600 padded], 2) + tanh
    a = jnp.dot(h2, w3_ref[...], preferred_element_type=jnp.float32)    # (tb, 2) f32
    o_ref[...] = jnp.tanh(a + b3_ref[...]).astype(o_ref.dtype)


def _choose_tiles(batch, block_b):
    """Pick (padded_batch, batch_tile) minimising padding waste."""
    pb = _round_up(max(batch, 8), 8)
    steps = max(1, -(-pb // block_b))
    # v7x: make sure the 'parallel' batch axis has >= 2 grid steps for large batches
    # so both TensorCores are used (weight DMA duplication is negligible).
    if _IS_MEGACORE and steps == 1 and pb >= 256:
        steps = 2
    tb = _round_up(-(-pb // steps), 8)
    pb = steps * tb
    return pb, tb


@functools.partial(jax.jit, static_argnames=("block_b",))
def actor_forward(x, params, *, block_b=512):
    w1, b1, w2, b2, w3, b3 = params
    batch = x.shape[0]

    pb, tb = _choose_tiles(batch, block_b)
    if pb != batch:
        x = jnp.pad(x, ((0, pb - batch), (0, 0)))

    grid = (pb // tb,)

    flops = 2 * pb * (STATE_DIM * H1_PAD + H1_PAD * H2_PAD + H2_PAD * ACTION_DIM)
    bytes_accessed = (
        pb * STATE_DIM * 4 + pb * ACTION_DIM * 4          # x, out
        + STATE_DIM * H1_PAD * 2 + H1_PAD * 4             # w1 (bf16), b1 (f32)
        + H1_PAD * H2_PAD * 2 + H2_PAD * 4                # w2 (bf16), b2 (f32)
        + H2_PAD * ACTION_DIM * 2 + ACTION_DIM * 4        # w3 (bf16), b3 (f32)
    )

    kernel = functools.partial(actor_kernel, compute_dtype=_COMPUTE_DTYPE)

    out = pl.pallas_call(
        kernel,
        out_shape=jax.ShapeDtypeStruct((pb, ACTION_DIM), jnp.float32),
        grid=grid,
        in_specs=[
            pl.BlockSpec((tb, STATE_DIM), lambda i: (i, 0)),          # x
            pl.BlockSpec((STATE_DIM, H1_PAD), lambda i: (0, 0)),      # w1
            pl.BlockSpec((1, H1_PAD), lambda i: (0, 0)),              # b1
            pl.BlockSpec((H1_PAD, H2_PAD), lambda i: (0, 0)),         # w2
            pl.BlockSpec((1, H2_PAD), lambda i: (0, 0)),              # b2
            pl.BlockSpec((H2_PAD, ACTION_DIM), lambda i: (0, 0)),     # w3
            pl.BlockSpec((1, ACTION_DIM), lambda i: (0, 0)),          # b3
        ],
        out_specs=pl.BlockSpec((tb, ACTION_DIM), lambda i: (i, 0)),
        compiler_params=pltpu.CompilerParams(
            dimension_semantics=("parallel",)),
        cost_estimate=pl.CostEstimate(
            flops=flops,
            transcendentals=pb * ACTION_DIM,
            bytes_accessed=bytes_accessed),
    )(x, w1, b1, w2, b2, w3, b3)

    return out[:batch]


def init_params(key):
    """Deterministic init mirroring nn.Linear's default U(-1/sqrt(fan_in), +1/sqrt(fan_in)).

    Weights are stored [in, out] (transposed from PyTorch) in bfloat16; biases in
    float32. Hidden dims are zero-padded 800->896 and 600->640 (numerically exact).
    """
    ks = jax.random.split(key, 6)

    def linear(kw, kb, fan_in, fan_out):
        bound = 1.0 / jnp.sqrt(jnp.float32(fan_in))
        w = jax.random.uniform(kw, (fan_in, fan_out), jnp.float32, -bound, bound)
        b = jax.random.uniform(kb, (1, fan_out), jnp.float32, -bound, bound)
        return w, b

    w1, b1 = linear(ks[0], ks[1], STATE_DIM, H1)
    w2, b2 = linear(ks[2], ks[3], H1, H2)
    w3, b3 = linear(ks[4], ks[5], H2, ACTION_DIM)

    w1 = jnp.pad(w1, ((0, 0), (0, H1_PAD - H1))).astype(jnp.bfloat16)
    b1 = jnp.pad(b1, ((0, 0), (0, H1_PAD - H1)))
    w2 = jnp.pad(w2, ((0, H1_PAD - H1), (0, H2_PAD - H2))).astype(jnp.bfloat16)
    b2 = jnp.pad(b2, ((0, 0), (0, H2_PAD - H2)))
    w3 = jnp.pad(w3, ((0, H2_PAD - H2), (0, 0))).astype(jnp.bfloat16)

    return (w1, b1, w2, b2, w3, b3)


def actor_ref(x, params, compute_dtype=_COMPUTE_DTYPE):
    """Pure-JAX reference performing the same mixed-precision math as the kernel."""
    w1, b1, w2, b2, w3, b3 = params
    cdt = compute_dtype
    xc = x.astype(cdt)
    w1c = w1.astype(cdt)
    h = (xc[:, 0:1] * w1c[0:1, :]
         + xc[:, 1:2] * w1c[1:2, :]
         + xc[:, 2:3] * w1c[2:3, :]
         + b1.astype(cdt))
    h = jnp.maximum(h, 0.0).astype(jnp.bfloat16)
    acc = jnp.dot(h, w2, preferred_element_type=jnp.float32)
    h2 = jnp.maximum(acc.astype(cdt) + b2.astype(cdt), 0.0).astype(jnp.bfloat16)
    a = jnp.dot(h2, w3, preferred_element_type=jnp.float32)
    return jnp.tanh(a + b3)


if __name__ == "__main__":
    key = jax.random.PRNGKey(0)
    kp, kx = jax.random.split(key)
    params = init_params(kp)

    batch = 8
    x = jax.random.normal(kx, (batch, STATE_DIM), jnp.float32)

    out = actor_forward(x, params)
    out = jax.block_until_ready(out)

    ref = actor_ref(x, params)
    assert out.shape == (batch, ACTION_DIM), out.shape

    # bf16 VPU path has looser element-wise rounding than the f32 path.
    tol = 2e-2 if _COMPUTE_DTYPE == jnp.bfloat16 else 2e-3
    assert jnp.allclose(out, ref, atol=tol, rtol=tol), "mismatch vs reference"

    print("KERNEL_OK")
</pallas_src>

<mosaic_0001>
module attributes {stable_mosaic.version = 11 : i64} {
  func.func @actor_kernel(%arg0: i32, %arg1: memref<8x3xf32, #tpu.memory_space<vmem>>, %arg2: memref<3x896xbf16, #tpu.memory_space<vmem>>, %arg3: memref<1x896xf32, #tpu.memory_space<vmem>>, %arg4: memref<896x640xbf16, #tpu.memory_space<vmem>>, %arg5: memref<1x640xf32, #tpu.memory_space<vmem>>, %arg6: memref<640x2xbf16, #tpu.memory_space<vmem>>, %arg7: memref<1x2xf32, #tpu.memory_space<vmem>>, %arg8: memref<8x2xf32, #tpu.memory_space<vmem>>) attributes {dimension_semantics = [#tpu.dimension_semantics<parallel>], iteration_bounds = array<i64: 1>, scalar_prefetch = 0 : i64, scratch_operands = 0 : i64, tpu.core_type = #tpu.core_type<tc>, window_params = [{transform_indices = @transform_0, window_bounds = array<i64: 8, 3>}, {pipeline_mode = #tpu.pipeline_mode<synchronous>, transform_indices = @transform_1, window_bounds = array<i64: 3, 896>}, {pipeline_mode = #tpu.pipeline_mode<synchronous>, transform_indices = @transform_2, window_bounds = array<i64: 1, 896>}, {pipeline_mode = #tpu.pipeline_mode<synchronous>, transform_indices = @transform_3, window_bounds = array<i64: 896, 640>}, {pipeline_mode = #tpu.pipeline_mode<synchronous>, transform_indices = @transform_4, window_bounds = array<i64: 1, 640>}, {pipeline_mode = #tpu.pipeline_mode<synchronous>, transform_indices = @transform_5, window_bounds = array<i64: 640, 2>}, {pipeline_mode = #tpu.pipeline_mode<synchronous>, transform_indices = @transform_6, window_bounds = array<i64: 1, 2>}, {transform_indices = @transform_7, window_bounds = array<i64: 8, 2>}]} {
    %c0 = arith.constant 0 : index
    %c0_0 = arith.constant 0 : index
    %0 = vector.load %arg1[%c0, %c0_0] : memref<8x3xf32, #tpu.memory_space<vmem>>, vector<8x3xf32>
    %c0_1 = arith.constant 0 : index
    %c0_2 = arith.constant 0 : index
    %1 = vector.load %arg2[%c0_1, %c0_2] : memref<3x896xbf16, #tpu.memory_space<vmem>>, vector<3x896xbf16>
    %2 = arith.extf %1 : vector<3x896xbf16> to vector<3x896xf32>
    %c0_3 = arith.constant 0 : index
    %c0_4 = arith.constant 0 : index
    %3 = vector.load %arg3[%c0_3, %c0_4] : memref<1x896xf32, #tpu.memory_space<vmem>>, vector<1x896xf32>
    %4 = vector.extract_strided_slice %0 {offsets = [0, 0], sizes = [8, 1], strides = [1, 1]} : vector<8x3xf32> to vector<8x1xf32>
    %5 = vector.extract_strided_slice %2 {offsets = [0, 0], sizes = [1, 896], strides = [1, 1]} : vector<3x896xf32> to vector<1x896xf32>
    %6 = vector.broadcast %4 : vector<8x1xf32> to vector<8x896xf32>
    %7 = vector.broadcast %5 : vector<1x896xf32> to vector<8x896xf32>
    %8 = arith.mulf %6, %7 : vector<8x896xf32>
    %9 = vector.extract_strided_slice %0 {offsets = [0, 1], sizes = [8, 1], strides = [1, 1]} : vector<8x3xf32> to vector<8x1xf32>
    %10 = vector.extract_strided_slice %2 {offsets = [1, 0], sizes = [1, 896], strides = [1, 1]} : vector<3x896xf32> to vector<1x896xf32>
    %11 = vector.broadcast %9 : vector<8x1xf32> to vector<8x896xf32>
    %12 = vector.broadcast %10 : vector<1x896xf32> to vector<8x896xf32>
    %13 = arith.mulf %11, %12 : vector<8x896xf32>
    %14 = arith.addf %8, %13 : vector<8x896xf32>
    %15 = vector.extract_strided_slice %0 {offsets = [0, 2], sizes = [8, 1], strides = [1, 1]} : vector<8x3xf32> to vector<8x1xf32>
    %16 = vector.extract_strided_slice %2 {offsets = [2, 0], sizes = [1, 896], strides = [1, 1]} : vector<3x896xf32> to vector<1x896xf32>
    %17 = vector.broadcast %15 : vector<8x1xf32> to vector<8x896xf32>
    %18 = vector.broadcast %16 : vector<1x896xf32> to vector<8x896xf32>
    %19 = arith.mulf %17, %18 : vector<8x896xf32>
    %20 = arith.addf %14, %19 : vector<8x896xf32>
    %21 = vector.broadcast %3 : vector<1x896xf32> to vector<8x896xf32>
    %22 = arith.addf %20, %21 : vector<8x896xf32>
    %cst = arith.constant 0.000000e+00 : f32
    %23 = vector.broadcast %cst : f32 to vector<8x896xf32>
    %24 = arith.maximumf %22, %23 : vector<8x896xf32>
    %25 = arith.truncf %24 : vector<8x896xf32> to vector<8x896xbf16>
    %c0_5 = arith.constant 0 : index
    %c0_6 = arith.constant 0 : index
    %26 = vector.load %arg4[%c0_5, %c0_6] : memref<896x640xbf16, #tpu.memory_space<vmem>>, vector<896x640xbf16>
    %cst_7 = arith.constant dense<0.000000e+00> : vector<8x640xf32>
    %27 = tpu.matmul %25, %26, %cst_7 {dimension_numbers = #tpu.dot_dimension_numbers<[1], [0], [0], [1], [0, 0, 1, 1], [], []>} : vector<8x896xbf16>, vector<896x640xbf16>, vector<8x640xf32> -> vector<8x640xf32>
    %c0_8 = arith.constant 0 : index
    %c0_9 = arith.constant 0 : index
    %28 = vector.load %arg5[%c0_8, %c0_9] : memref<1x640xf32, #tpu.memory_space<vmem>>, vector<1x640xf32>
    %29 = vector.broadcast %28 : vector<1x640xf32> to vector<8x640xf32>
    %30 = arith.addf %27, %29 : vector<8x640xf32>
    %cst_10 = arith.constant 0.000000e+00 : f32
    %31 = vector.broadcast %cst_10 : f32 to vector<8x640xf32>
    %32 = arith.maximumf %30, %31 : vector<8x640xf32>
    %33 = arith.truncf %32 : vector<8x640xf32> to vector<8x640xbf16>
    %c0_11 = arith.constant 0 : index
    %c0_12 = arith.constant 0 : index
    %34 = vector.load %arg6[%c0_11, %c0_12] : memref<640x2xbf16, #tpu.memory_space<vmem>>, vector<640x2xbf16>
    %cst_13 = arith.constant dense<0.000000e+00> : vector<8x2xf32>
    %35 = tpu.matmul %33, %34, %cst_13 {dimension_numbers = #tpu.dot_dimension_numbers<[1], [0], [0], [1], [0, 0, 1, 1], [], []>} : vector<8x640xbf16>, vector<640x2xbf16>, vector<8x2xf32> -> vector<8x2xf32>
    %c0_14 = arith.constant 0 : index
    %c0_15 = arith.constant 0 : index
    %36 = vector.load %arg7[%c0_14, %c0_15] : memref<1x2xf32, #tpu.memory_space<vmem>>, vector<1x2xf32>
    %37 = vector.broadcast %36 : vector<1x2xf32> to vector<8x2xf32>
    %38 = arith.addf %35, %37 : vector<8x2xf32>
    %39 = math.tanh %38 : vector<8x2xf32>
    %c0_16 = arith.constant 0 : index
    %c0_17 = arith.constant 0 : index
    %40 = vector.load %arg8[%c0_16, %c0_17] : memref<8x2xf32, #tpu.memory_space<vmem>>, vector<8x2xf32>
    tpu.vector_store %arg8[%c0_16, %c0_17], %39 {strides = array<i32>} : memref<8x2xf32, #tpu.memory_space<vmem>>, vector<8x2xf32>,
    return
  }
  func.func @transform_0(%arg0: i32) -> (i32, i32) {
    %c0_i32 = arith.constant 0 : i32
    %c0_i32_0 = arith.constant 0 : i32
    return %arg0, %c0_i32 : i32, i32
  }
  func.func @transform_1(%arg0: i32) -> (i32, i32) {
    %c0_i32 = arith.constant 0 : i32
    %c0_i32_0 = arith.constant 0 : i32
    %c0_i32_1 = arith.constant 0 : i32
    return %c0_i32, %c0_i32_0 : i32, i32
  }
  func.func @transform_2(%arg0: i32) -> (i32, i32) {
    %c0_i32 = arith.constant 0 : i32
    %c0_i32_0 = arith.constant 0 : i32
    %c0_i32_1 = arith.constant 0 : i32
    return %c0_i32, %c0_i32_0 : i32, i32
  }
  func.func @transform_3(%arg0: i32) -> (i32, i32) {
    %c0_i32 = arith.constant 0 : i32
    %c0_i32_0 = arith.constant 0 : i32
    %c0_i32_1 = arith.constant 0 : i32
    return %c0_i32, %c0_i32_0 : i32, i32
  }
  func.func @transform_4(%arg0: i32) -> (i32, i32) {
    %c0_i32 = arith.constant 0 : i32
    %c0_i32_0 = arith.constant 0 : i32
    %c0_i32_1 = arith.constant 0 : i32
    return %c0_i32, %c0_i32_0 : i32, i32
  }
  func.func @transform_5(%arg0: i32) -> (i32, i32) {
    %c0_i32 = arith.constant 0 : i32
    %c0_i32_0 = arith.constant 0 : i32
    %c0_i32_1 = arith.constant 0 : i32
    return %c0_i32, %c0_i32_0 : i32, i32
  }
  func.func @transform_6(%arg0: i32) -> (i32, i32) {
    %c0_i32 = arith.constant 0 : i32
    %c0_i32_0 = arith.constant 0 : i32
    %c0_i32_1 = arith.constant 0 : i32
    return %c0_i32, %c0_i32_0 : i32, i32
  }
  func.func @transform_7(%arg0: i32) -> (i32, i32) {
    %c0_i32 = arith.constant 0 : i32
    %c0_i32_0 = arith.constant 0 : i32
    return %arg0, %c0_i32 : i32, i32
  }
}

</mosaic_0001>

<llo_original>
// kernel: actor_forward.1
$region0: #{actor_forward.1}
  #allocation0 [shape = 'u32[]', space=smem, size = 0x4, offset = 0x4, fixed_abs, tag = 'smem constant byte address 0x4 - core index']
  #allocation1 [shape = 'u32[144,128]{1,0:T(1,128)}', space=vmem, size = 0x12000, scoped, tag = 'internal scratch']
  %s0 = inlined_call_operand.vmem [shape: f32[8,3], index: 0, kind: input, shape index: {}]
  %s1 = inlined_call_operand.hbm [shape: bf16[3,896], index: 1, kind: input, shape index: {}]
  %s2 = inlined_call_operand.hbm [shape: f32[1,896], index: 2, kind: input, shape index: {}]
  %s3 = inlined_call_operand.hbm [shape: bf16[896,640], index: 3, kind: input, shape index: {}]
  %s4 = inlined_call_operand.hbm [shape: f32[1,640], index: 4, kind: input, shape index: {}]
  %s5 = inlined_call_operand.vmem [shape: bf16[640,2], index: 5, kind: input, shape index: {}]
  %s6 = inlined_call_operand.hbm [shape: f32[1,2], index: 6, kind: input, shape index: {}]
  %s7 = inlined_call_operand.vmem [shape: f32[8,2], index: 7, kind: output, shape index: {}]
  %s8 = sld [smem:[#allocation0]]
  $region58: #{actor_forward.1} parent=0
    _
  %s10 = ssub.s32 1, %s8
  %s11 = scalar_select 0, %s10, %s8
  $region1: #{actor_forward.1} parent=0
    #allocation2 [shape = 'u8[7168]{0}', space=vmem, size = 0x1c00, scoped, tag = 'input window, operand 1, single buffered']
    #allocation3 [shape = 's32[1]{0}', space=sflag, size = 0x4, scoped, tag = 'scoped memory for actor_forward.1']
    #allocation4 [shape = 'u8[3584]{0}', space=vmem, size = 0x1000, scoped, tag = 'input window, operand 2, single buffered']
    #allocation5 [shape = 's32[1]{0}', space=sflag, size = 0x4, scoped, tag = 'scoped memory for actor_forward.1']
    #allocation6 [shape = 'u8[1146880]{0}', space=vmem, size = 0x118000, scoped, tag = 'input window, operand 3, single buffered']
    #allocation7 [shape = 'u8[2560]{0}', space=vmem, size = 0xc00, scoped, tag = 'input window, operand 4, single buffered']
    #allocation8 [shape = 's32[1]{0}', space=sflag, size = 0x4, scoped, tag = 'scoped memory for actor_forward.1']
    #allocation9 [shape = 'u8[512]{0}', space=vmem, size = 0x400, scoped, tag = 'input window, operand 6, single buffered']
    %12 = vsyncpa [#allocation3], 0
    %13 = vsyncpa [#allocation5], 0
    %14 = vsyncpa [#allocation8], 0
    // Predicated region
    $region2: #{actor_forward.1} parent=1 // pred_check
      _
    $region3: #{actor_forward.1} parent=1 // pred_check_branch
      %16 = sbr.rel (0) target = $region5
    $region4: #{actor_forward.1} parent=1 // pred_region
      _
    $region5: #{actor_forward.1} parent=1 // pred_fallthru
      _
    // Predicated region
    $region6: #{actor_forward.1} parent=1 // pred_check
      _
    $region7: #{actor_forward.1} parent=1 // pred_check_branch
      %18 = sbr.rel (0) target = $region9
    $region8: #{actor_forward.1} parent=1 // pred_region
      %s20 = ssub.s32 224, 224
      %21 = vsyncadd [#allocation3], %s20
      %s23 = sshll.u32 [#allocation2], 4
      %s24 = int_to_ptr.vmem [resolvable:$true] %s23
      %26 = dma.hbm_to_vmem [thread:$0]  %s1, 224, %s24, [#allocation3]
    $region9: #{actor_forward.1} parent=1 // pred_fallthru
      _
    // Predicated region
    $region10: #{actor_forward.1} parent=1 // pred_check
      _
    $region11: #{actor_forward.1} parent=1 // pred_check_branch
      %28 = sbr.rel (0) target = $region13
    $region12: #{actor_forward.1} parent=1 // pred_region
      %s30 = ssub.s32 112, 112
      %31 = vsyncadd [#allocation5], %s30
      %s33 = sshll.u32 [#allocation4], 4
      %s34 = int_to_ptr.vmem [resolvable:$true] %s33
      %36 = dma.hbm_to_vmem [thread:$0]  %s2, 112, %s34, [#allocation5]
    $region13: #{actor_forward.1} parent=1 // pred_fallthru
      _
    // Predicated region
    $region14: #{actor_forward.1} parent=1 // pred_check
      _
    $region15: #{actor_forward.1} parent=1 // pred_check_branch
      %38 = sbr.rel (0) target = $region17
    $region16: #{actor_forward.1} parent=1 // pred_region
      %s40 = ssub.s32 35840, 35840
      %41 = vsyncadd [#allocation5], %s40
      %s42 = sshll.u32 [#allocation6], 4
      %s43 = int_to_ptr.vmem [resolvable:$true] %s42
      %48 = dma.hbm_to_vmem [thread:$0]  %s3, 35840, %s43, [#allocation5], 320, 320, 20
    $region17: #{actor_forward.1} parent=1 // pred_fallthru
      _
    // Predicated region
    $region18: #{actor_forward.1} parent=1 // pred_check
      _
    $region19: #{actor_forward.1} parent=1 // pred_check_branch
      %50 = sbr.rel (0) target = $region21
    $region20: #{actor_forward.1} parent=1 // pred_region
      %s52 = ssub.s32 80, 80
      %53 = vsyncadd [#allocation8], %s52
      %s55 = sshll.u32 [#allocation7], 4
      %s56 = int_to_ptr.vmem [resolvable:$true] %s55
      %58 = dma.hbm_to_vmem [thread:$0]  %s4, 80, %s56, [#allocation8]
    $region21: #{actor_forward.1} parent=1 // pred_fallthru
      _
    // Predicated region
    $region22: #{actor_forward.1} parent=1 // pred_check
      _
    $region23: #{actor_forward.1} parent=1 // pred_check_branch
      %60 = sbr.rel (0) target = $region25
    $region24: #{actor_forward.1} parent=1 // pred_region
      _
    $region25: #{actor_forward.1} parent=1 // pred_fallthru
      _
    // Predicated region
    $region26: #{actor_forward.1} parent=1 // pred_check
      _
    $region27: #{actor_forward.1} parent=1 // pred_check_branch
      %62 = sbr.rel (0) target = $region29
    $region28: #{actor_forward.1} parent=1 // pred_region
      %s64 = ssub.s32 16, 16
      %65 = vsyncadd [#allocation8], %s64
      %s67 = sshll.u32 [#allocation9], 4
      %s68 = int_to_ptr.vmem [resolvable:$true] %s67
      %70 = dma.hbm_to_vmem [thread:$0]  %s6, 16, %s68, [#allocation8]
    $region29: #{actor_forward.1} parent=1 // pred_fallthru
      _
    // Predicated region
    $region30: #{actor_forward.1} parent=1 // pred_check
      _
    $region31: #{actor_forward.1} parent=1 // pred_check_branch
      %72 = sbr.rel (0) target = $region33
    $region32: #{actor_forward.1} parent=1 // pred_region
      %73 = dma.done [#allocation3], 224
    $region33: #{actor_forward.1} parent=1 // pred_fallthru
      _
    // Predicated region
    $region34: #{actor_forward.1} parent=1 // pred_check
      _
    $region35: #{actor_forward.1} parent=1 // pred_check_branch
      %75 = sbr.rel (0) target = $region37
    $region36: #{actor_forward.1} parent=1 // pred_region
      %76 = dma.done [#allocation5], 112
    $region37: #{actor_forward.1} parent=1 // pred_fallthru
      _
    // Predicated region
    $region38: #{actor_forward.1} parent=1 // pred_check
      _
    $region39: #{actor_forward.1} parent=1 // pred_check_branch
      %78 = sbr.rel (0) target = $region41
    $region40: #{actor_forward.1} parent=1 // pred_region
      %79 = dma.done [#allocation5], 35840
    $region41: #{actor_forward.1} parent=1 // pred_fallthru
      _
    // Predicated region
    $region42: #{actor_forward.1} parent=1 // pred_check
      _
    $region43: #{actor_forward.1} parent=1 // pred_check_branch
      %81 = sbr.rel (0) target = $region45
    $region44: #{actor_forward.1} parent=1 // pred_region
      %82 = dma.done [#allocation8], 80
    $region45: #{actor_forward.1} parent=1 // pred_fallthru
      _
    // Predicated region
    $region46: #{actor_forward.1} parent=1 // pred_check
      _
    $region47: #{actor_forward.1} parent=1 // pred_check_branch
      %84 = sbr.rel (0) target = $region49
    $region48: #{actor_forward.1} parent=1 // pred_region
      %85 = dma.done [#allocation8], 16
    $region49: #{actor_forward.1} parent=1 // pred_fallthru
      _
    %v87 = vld [vmem:[%s0] sm:$0xff]
    %v88 = vld [vmem:[#allocation2] sm:$0xff]
    %v89 = vld [vmem:[#allocation2 + $0x8] sm:$0x3f]
    %v90 = vunpack.c.l.bf16 %v88
    %v91 = vunpack.c.h.bf16 %v88
    %v92 = vunpack.c.l.bf16 %v89
    %v93 = vunpack.c.h.bf16 %v89
    %v94 = vld [vmem:[#allocation4] sm:$0xff]
    %96 = vset.pattern.permute.xlu0 0
    %97 = vperm.xlu0 %96, %v87
    %v98 = vpop.permute.xlu0 %97
    %v104 = vlaneseq
    %v105 = vshrl.u32 %v104, 7
    %v106 = vsub.s32 0, %v105
    %v107 = vrot.slane %v90, %v106
    %v108 = vlaneseq
    %v109 = vshrl.u32 %v108, 7
    %v110 = vsub.s32 4, %v109
    %v111 = vrot.slane %v90, %v110
    %v112 = vlaneseq
    %v113 = vshrl.u32 %v112, 7
    %v114 = vsub.s32 0, %v113
    %v115 = vrot.slane %v91, %v114
    %v116 = vlaneseq
    %v117 = vshrl.u32 %v116, 7
    %v118 = vsub.s32 4, %v117
    %v119 = vrot.slane %v91, %v118
    %v120 = vlaneseq
    %v121 = vshrl.u32 %v120, 7
    %v122 = vsub.s32 0, %v121
    %v123 = vrot.slane %v92, %v122
    %v124 = vlaneseq
    %v125 = vshrl.u32 %v124, 7
    %v126 = vsub.s32 4, %v125
    %v127 = vrot.slane %v92, %v126
    %v128 = vlaneseq
    %v129 = vshrl.u32 %v128, 7
    %v130 = vsub.s32 0, %v129
    %v131 = vrot.slane %v93, %v130
    %v139 = vlaneseq
    %v140 = vshrl.u32 %v139, 7
    %v141 = vsub.s32 0, %v140
    %v142 = vrot.slane %v107, %v141
    %v143 = vlaneseq
    %v144 = vshrl.u32 %v143, 7
    %v145 = vsub.s32 0, %v144
    %v146 = vrot.slane %v111, %v145
    %v147 = vlaneseq
    %v148 = vshrl.u32 %v147, 7
    %v149 = vsub.s32 0, %v148
    %v150 = vrot.slane %v115, %v149
    %v151 = vlaneseq
    %v152 = vshrl.u32 %v151, 7
    %v153 = vsub.s32 0, %v152
    %v154 = vrot.slane %v119, %v153
    %v155 = vlaneseq
    %v156 = vshrl.u32 %v155, 7
    %v157 = vsub.s32 0, %v156
    %v158 = vrot.slane %v123, %v157
    %v159 = vlaneseq
    %v160 = vshrl.u32 %v159, 7
    %v161 = vsub.s32 0, %v160
    %v162 = vrot.slane %v127, %v161
    %v163 = vlaneseq
    %v164 = vshrl.u32 %v163, 7
    %v165 = vsub.s32 0, %v164
    %v166 = vrot.slane %v131, %v165
    %v167 = vmul.f32 %v98, %v142
    %v168 = vmul.f32 %v98, %v146
    %v169 = vmul.f32 %v98, %v150
    %v170 = vmul.f32 %v98, %v154
    %v171 = vmul.f32 %v98, %v158
    %v172 = vmul.f32 %v98, %v162
    %v173 = vmul.f32 %v98, %v166
    %174 = vset.pattern.permute.xlu0 1
    %175 = vperm.xlu0 %174, %v87
    %v176 = vpop.permute.xlu0 %175
    %v178 = vlaneseq
    %v179 = vshrl.u32 %v178, 7
    %v180 = vsub.s32 1, %v179
    %v181 = vrot.slane %v90, %v180
    %v182 = vlaneseq
    %v183 = vshrl.u32 %v182, 7
    %v184 = vsub.s32 5, %v183
    %v185 = vrot.slane %v90, %v184
    %v186 = vlaneseq
    %v187 = vshrl.u32 %v186, 7
    %v188 = vsub.s32 1, %v187
    %v189 = vrot.slane %v91, %v188
    %v190 = vlaneseq
    %v191 = vshrl.u32 %v190, 7
    %v192 = vsub.s32 5, %v191
    %v193 = vrot.slane %v91, %v192
    %v194 = vlaneseq
    %v195 = vshrl.u32 %v194, 7
    %v196 = vsub.s32 1, %v195
    %v197 = vrot.slane %v92, %v196
    %v198 = vlaneseq
    %v199 = vshrl.u32 %v198, 7
    %v200 = vsub.s32 5, %v199
    %v201 = vrot.slane %v92, %v200
    %v202 = vlaneseq
    %v203 = vshrl.u32 %v202, 7
    %v204 = vsub.s32 1, %v203
    %v205 = vrot.slane %v93, %v204
    %v213 = vlaneseq
    %v214 = vshrl.u32 %v213, 7
    %v215 = vsub.s32 1, %v214
    %v216 = vrot.slane %v181, %v215
    %v217 = vlaneseq
    %v218 = vshrl.u32 %v217, 7
    %v219 = vsub.s32 1, %v218
    %v220 = vrot.slane %v185, %v219
    %v221 = vlaneseq
    %v222 = vshrl.u32 %v221, 7
    %v223 = vsub.s32 1, %v222
    %v224 = vrot.slane %v189, %v223
    %v225 = vlaneseq
    %v226 = vshrl.u32 %v225, 7
    %v227 = vsub.s32 1, %v226
    %v228 = vrot.slane %v193, %v227
    %v229 = vlaneseq
    %v230 = vshrl.u32 %v229, 7
    %v231 = vsub.s32 1, %v230
    %v232 = vrot.slane %v197, %v231
    %v233 = vlaneseq
    %v234 = vshrl.u32 %v233, 7
    %v235 = vsub.s32 1, %v234
    %v236 = vrot.slane %v201, %v235
    %v237 = vlaneseq
    %v238 = vshrl.u32 %v237, 7
    %v239 = vsub.s32 1, %v238
    %v240 = vrot.slane %v205, %v239
    %v241 = vmul.f32 %v176, %v216
    %v242 = vmul.f32 %v176, %v220
    %v243 = vmul.f32 %v176, %v224
    %v244 = vmul.f32 %v176, %v228
    %v245 = vmul.f32 %v176, %v232
    %v246 = vmul.f32 %v176, %v236
    %v247 = vmul.f32 %v176, %v240
    %v248 = vadd.f32 %v167, %v241
    %v249 = vadd.f32 %v168, %v242
    %v250 = vadd.f32 %v169, %v243
    %v251 = vadd.f32 %v170, %v244
    %v252 = vadd.f32 %v171, %v245
    %v253 = vadd.f32 %v172, %v246
    %v254 = vadd.f32 %v173, %v247
    %255 = vset.pattern.permute.xlu0 2
    %256 = vperm.xlu0 %255, %v87
    %v257 = vpop.permute.xlu0 %256
    %v259 = vlaneseq
    %v260 = vshrl.u32 %v259, 7
    %v261 = vsub.s32 2, %v260
    %v262 = vrot.slane %v90, %v261
    %v263 = vlaneseq
    %v264 = vshrl.u32 %v263, 7
    %v265 = vsub.s32 6, %v264
    %v266 = vrot.slane %v90, %v265
    %v267 = vlaneseq
    %v268 = vshrl.u32 %v267, 7
    %v269 = vsub.s32 2, %v268
    %v270 = vrot.slane %v91, %v269
    %v271 = vlaneseq
    %v272 = vshrl.u32 %v271, 7
    %v273 = vsub.s32 6, %v272
    %v274 = vrot.slane %v91, %v273
    %v275 = vlaneseq
    %v276 = vshrl.u32 %v275, 7
    %v277 = vsub.s32 2, %v276
    %v278 = vrot.slane %v92, %v277
    %v279 = vlaneseq
    %v280 = vshrl.u32 %v279, 7
    %v281 = vsub.s32 6, %v280
    %v282 = vrot.slane %v92, %v281
    %v283 = vlaneseq
    %v284 = vshrl.u32 %v283, 7
    %v285 = vsub.s32 2, %v284
    %v286 = vrot.slane %v93, %v285
    %v294 = vlaneseq
    %v295 = vshrl.u32 %v294, 7
    %v296 = vsub.s32 2, %v295
    %v297 = vrot.slane %v262, %v296
    %v298 = vlaneseq
    %v299 = vshrl.u32 %v298, 7
    %v300 = vsub.s32 2, %v299
    %v301 = vrot.slane %v266, %v300
    %v302 = vlaneseq
    %v303 = vshrl.u32 %v302, 7
    %v304 = vsub.s32 2, %v303
    %v305 = vrot.slane %v270, %v304
    %v306 = vlaneseq
    %v307 = vshrl.u32 %v306, 7
    %v308 = vsub.s32 2, %v307
    %v309 = vrot.slane %v274, %v308
    %v310 = vlaneseq
    %v311 = vshrl.u32 %v310, 7
    %v312 = vsub.s32 2, %v311
    %v313 = vrot.slane %v278, %v312
    %v314 = vlaneseq
    %v315 = vshrl.u32 %v314, 7
    %v316 = vsub.s32 2, %v315
    %v317 = vrot.slane %v282, %v316
    %v318 = vlaneseq
    %v319 = vshrl.u32 %v318, 7
    %v320 = vsub.s32 2, %v319
    %v321 = vrot.slane %v286, %v320
    %v322 = vmul.f32 %v257, %v297
    %v323 = vmul.f32 %v257, %v301
    %v324 = vmul.f32 %v257, %v305
    %v325 = vmul.f32 %v257, %v309
    %v326 = vmul.f32 %v257, %v313
    %v327 = vmul.f32 %v257, %v317
    %v328 = vmul.f32 %v257, %v321
    %v329 = vadd.f32 %v248, %v322
    %v330 = vadd.f32 %v249, %v323
    %v331 = vadd.f32 %v250, %v324
    %v332 = vadd.f32 %v251, %v325
    %v333 = vadd.f32 %v252, %v326
    %v334 = vadd.f32 %v253, %v327
    %v335 = vadd.f32 %v254, %v328
    %v337 = vlaneseq
    %v338 = vshrl.u32 %v337, 7
    %v339 = vsub.s32 0, %v338
    %v340 = vrot.slane %v94, %v339
    %v341 = vlaneseq
    %v342 = vshrl.u32 %v341, 7
    %v343 = vsub.s32 1, %v342
    %v344 = vrot.slane %v94, %v343
    %v345 = vlaneseq
    %v346 = vshrl.u32 %v345, 7
    %v347 = vsub.s32 2, %v346
    %v348 = vrot.slane %v94, %v347
    %v349 = vlaneseq
    %v350 = vshrl.u32 %v349, 7
    %v351 = vsub.s32 3, %v350
    %v352 = vrot.slane %v94, %v351
    %v353 = vlaneseq
    %v354 = vshrl.u32 %v353, 7
    %v355 = vsub.s32 4, %v354
    %v356 = vrot.slane %v94, %v355
    %v357 = vlaneseq
    %v358 = vshrl.u32 %v357, 7
    %v359 = vsub.s32 5, %v358
    %v360 = vrot.slane %v94, %v359
    %v361 = vlaneseq
    %v362 = vshrl.u32 %v361, 7
    %v363 = vsub.s32 6, %v362
    %v364 = vrot.slane %v94, %v363
    %v372 = vadd.f32 %v329, %v340
    %v373 = vadd.f32 %v330, %v344
    %v374 = vadd.f32 %v331, %v348
    %v375 = vadd.f32 %v332, %v352
    %v376 = vadd.f32 %v333, %v356
    %v377 = vadd.f32 %v334, %v360
    %v378 = vadd.f32 %v335, %v364
    %v379 = vmax.f32 %v372, 0.0
    %v380 = vmax.f32 %v373, 0.0
    %v381 = vmax.f32 %v374, 0.0
    %v382 = vmax.f32 %v375, 0.0
    %v383 = vmax.f32 %v376, 0.0
    %v384 = vmax.f32 %v377, 0.0
    %v385 = vmax.f32 %v378, 0.0
    %v386 = vpack.c.bf16 %v379, %v379
    %v387 = vpack.c.bf16 %v380, %v380
    %v388 = vpack.c.bf16 %v381, %v381
    %v389 = vpack.c.bf16 %v382, %v382
    %v390 = vpack.c.bf16 %v383, %v383
    %v391 = vpack.c.bf16 %v384, %v384
    %v392 = vpack.c.bf16 %v385, %v385
    %v393 = vld [vmem:[#allocation6] sm:$0xff]
    %v394 = vld [vmem:[#allocation6 + $0x8] sm:$0xff]
    %v395 = vld [vmem:[#allocation6 + $0x10] sm:$0xf]
    %v396 = vld [vmem:[#allocation6 + $0x14] sm:$0xff]
    %v397 = vld [vmem:[#allocation6 + $0x1c] sm:$0xff]
    %v398 = vld [vmem:[#allocation6 + $0x24] sm:$0xf]
    %v399 = vld [vmem:[#allocation6 + $0x28] sm:$0xff]
    %v400 = vld [vmem:[#allocation6 + $0x30] sm:$0xff]
    %v401 = vld [vmem:[#allocation6 + $0x38] sm:$0xf]
    %v402 = vld [vmem:[#allocation6 + $0x3c] sm:$0xff]
    %v403 = vld [vmem:[#allocation6 + $0x44] sm:$0xff]
    %v404 = vld [vmem:[#allocation6 + $0x4c] sm:$0xf]
    %v405 = vld [vmem:[#allocation6 + $0x50] sm:$0xff]
    %v406 = vld [vmem:[#allocation6 + $0x58] sm:$0xff]
    %v407 = vld [vmem:[#allocation6 + $0x60] sm:$0xf]
    %v408 = vld [vmem:[#allocation6 + $0x64] sm:$0xff]
    %v409 = vld [vmem:[#allocation6 + $0x6c] sm:$0xff]
    %v410 = vld [vmem:[#allocation6 + $0x74] sm:$0xf]
    %v411 = vld [vmem:[#allocation6 + $0x78] sm:$0xff]
    %v412 = vld [vmem:[#allocation6 + $0x80] sm:$0xff]
    %v413 = vld [vmem:[#allocation6 + $0x88] sm:$0xf]
    %v414 = vld [vmem:[#allocation6 + $0x8c] sm:$0xff]
    %v415 = vld [vmem:[#allocation6 + $0x94] sm:$0xff]
    %v416 = vld [vmem:[#allocation6 + $0x9c] sm:$0xf]
    %v417 = vld [vmem:[#allocation6 + $0xa0] sm:$0xff]
    %v418 = vld [vmem:[#allocation6 + $0xa8] sm:$0xff]
    %v419 = vld [vmem:[#allocation6 + $0xb0] sm:$0xf]
    %v420 = vld [vmem:[#allocation6 + $0xb4] sm:$0xff]
    %v421 = vld [vmem:[#allocation6 + $0xbc] sm:$0xff]
    %v422 = vld [vmem:[#allocation6 + $0xc4] sm:$0xf]
    %v423 = vld [vmem:[#allocation6 + $0xc8] sm:$0xff]
    %v424 = vld [vmem:[#allocation6 + $0xd0] sm:$0xff]
    %v425 = vld [vmem:[#allocation6 + $0xd8] sm:$0xf]
    %v426 = vld [vmem:[#allocation6 + $0xdc] sm:$0xff]
    %v427 = vld [vmem:[#allocation6 + $0xe4] sm:$0xff]
    %v428 = vld [vmem:[#allocation6 + $0xec] sm:$0xf]
    %v429 = vld [vmem:[#allocation6 + $0xf0] sm:$0xff]
    %v430 = vld [vmem:[#allocation6 + $0xf8] sm:$0xff]
    %v431 = vld [vmem:[#allocation6 + $0x100] sm:$0xf]
    %v432 = vld [vmem:[#allocation6 + $0x104] sm:$0xff]
    %v433 = vld [vmem:[#allocation6 + $0x10c] sm:$0xff]
    %v434 = vld [vmem:[#allocation6 + $0x114] sm:$0xf]
    %v435 = vld [vmem:[#allocation6 + $0x118] sm:$0xff]
    %v436 = vld [vmem:[#allocation6 + $0x120] sm:$0xff]
    %v437 = vld [vmem:[#allocation6 + $0x128] sm:$0xf]
    %v438 = vld [vmem:[#allocation6 + $0x12c] sm:$0xff]
    %v439 = vld [vmem:[#allocation6 + $0x134] sm:$0xff]
    %v440 = vld [vmem:[#allocation6 + $0x13c] sm:$0xf]
    %v441 = vld [vmem:[#allocation6 + $0x140] sm:$0xff]
    %v442 = vld [vmem:[#allocation6 + $0x148] sm:$0xff]
    %v443 = vld [vmem:[#allocation6 + $0x150] sm:$0xf]
    %v444 = vld [vmem:[#allocation6 + $0x154] sm:$0xff]
    %v445 = vld [vmem:[#allocation6 + $0x15c] sm:$0xff]
    %v446 = vld [vmem:[#allocation6 + $0x164] sm:$0xf]
    %v447 = vld [vmem:[#allocation6 + $0x168] sm:$0xff]
    %v448 = vld [vmem:[#allocation6 + $0x170] sm:$0xff]
    %v449 = vld [vmem:[#allocation6 + $0x178] sm:$0xf]
    %v450 = vld [vmem:[#allocation6 + $0x17c] sm:$0xff]
    %v451 = vld [vmem:[#allocation6 + $0x184] sm:$0xff]
    %v452 = vld [vmem:[#allocation6 + $0x18c] sm:$0xf]
    %v453 = vld [vmem:[#allocation6 + $0x190] sm:$0xff]
    %v454 = vld [vmem:[#allocation6 + $0x198] sm:$0xff]
    %v455 = vld [vmem:[#allocation6 + $0x1a0] sm:$0xf]
    %v456 = vld [vmem:[#allocation6 + $0x1a4] sm:$0xff]
    %v457 = vld [vmem:[#allocation6 + $0x1ac] sm:$0xff]
    %v458 = vld [vmem:[#allocation6 + $0x1b4] sm:$0xf]
    %v459 = vld [vmem:[#allocation6 + $0x1b8] sm:$0xff]
    %v460 = vld [vmem:[#allocation6 + $0x1c0] sm:$0xff]
    %v461 = vld [vmem:[#allocation6 + $0x1c8] sm:$0xf]
    %v462 = vld [vmem:[#allocation6 + $0x1cc] sm:$0xff]
    %v463 = vld [vmem:[#allocation6 + $0x1d4] sm:$0xff]
    %v464 = vld [vmem:[#allocation6 + $0x1dc] sm:$0xf]
    %v465 = vld [vmem:[#allocation6 + $0x1e0] sm:$0xff]
    %v466 = vld [vmem:[#allocation6 + $0x1e8] sm:$0xff]
    %v467 = vld [vmem:[#allocation6 + $0x1f0] sm:$0xf]
    %v468 = vld [vmem:[#allocation6 + $0x1f4] sm:$0xff]
    %v469 = vld [vmem:[#allocation6 + $0x1fc] sm:$0xff]
    %v470 = vld [vmem:[#allocation6 + $0x204] sm:$0xf]
    %v471 = vld [vmem:[#allocation6 + $0x208] sm:$0xff]
    %v472 = vld [vmem:[#allocation6 + $0x210] sm:$0xff]
    %v473 = vld [vmem:[#allocation6 + $0x218] sm:$0xf]
    %v474 = vld [vmem:[#allocation6 + $0x21c] sm:$0xff]
    %v475 = vld [vmem:[#allocation6 + $0x224] sm:$0xff]
    %v476 = vld [vmem:[#allocation6 + $0x22c] sm:$0xf]
    %v477 = vld [vmem:[#allocation6 + $0x230] sm:$0xff]
    %v478 = vld [vmem:[#allocation6 + $0x238] sm:$0xff]
    %v479 = vld [vmem:[#allocation6 + $0x240] sm:$0xf]
    %v480 = vld [vmem:[#allocation6 + $0x244] sm:$0xff]
    %v481 = vld [vmem:[#allocation6 + $0x24c] sm:$0xff]
    %v482 = vld [vmem:[#allocation6 + $0x254] sm:$0xf]
    %v483 = vld [vmem:[#allocation6 + $0x258] sm:$0xff]
    %v484 = vld [vmem:[#allocation6 + $0x260] sm:$0xff]
    %v485 = vld [vmem:[#allocation6 + $0x268] sm:$0xf]
    %v486 = vld [vmem:[#allocation6 + $0x26c] sm:$0xff]
    %v487 = vld [vmem:[#allocation6 + $0x274] sm:$0xff]
    %v488 = vld [vmem:[#allocation6 + $0x27c] sm:$0xf]
    %v489 = vld [vmem:[#allocation6 + $0x280] sm:$0xff]
    %v490 = vld [vmem:[#allocation6 + $0x288] sm:$0xff]
    %v491 = vld [vmem:[#allocation6 + $0x290] sm:$0xf]
    %v492 = vld [vmem:[#allocation6 + $0x294] sm:$0xff]
    %v493 = vld [vmem:[#allocation6 + $0x29c] sm:$0xff]
    %v494 = vld [vmem:[#allocation6 + $0x2a4] sm:$0xf]
    %v495 = vld [vmem:[#allocation6 + $0x2a8] sm:$0xff]
    %v496 = vld [vmem:[#allocation6 + $0x2b0] sm:$0xff]
    %v497 = vld [vmem:[#allocation6 + $0x2b8] sm:$0xf]
    %v498 = vld [vmem:[#allocation6 + $0x2bc] sm:$0xff]
    %v499 = vld [vmem:[#allocation6 + $0x2c4] sm:$0xff]
    %v500 = vld [vmem:[#allocation6 + $0x2cc] sm:$0xf]
    %v501 = vld [vmem:[#allocation6 + $0x2d0] sm:$0xff]
    %v502 = vld [vmem:[#allocation6 + $0x2d8] sm:$0xff]
    %v503 = vld [vmem:[#allocation6 + $0x2e0] sm:$0xf]
    %v504 = vld [vmem:[#allocation6 + $0x2e4] sm:$0xff]
    %v505 = vld [vmem:[#allocation6 + $0x2ec] sm:$0xff]
    %v506 = vld [vmem:[#allocation6 + $0x2f4] sm:$0xf]
    %v507 = vld [vmem:[#allocation6 + $0x2f8] sm:$0xff]
    %v508 = vld [vmem:[#allocation6 + $0x300] sm:$0xff]
    %v509 = vld [vmem:[#allocation6 + $0x308] sm:$0xf]
    %v510 = vld [vmem:[#allocation6 + $0x30c] sm:$0xff]
    %v511 = vld [vmem:[#allocation6 + $0x314] sm:$0xff]
    %v512 = vld [vmem:[#allocation6 + $0x31c] sm:$0xf]
    %v513 = vld [vmem:[#allocation6 + $0x320] sm:$0xff]
    %v514 = vld [vmem:[#allocation6 + $0x328] sm:$0xff]
    %v515 = vld [vmem:[#allocation6 + $0x330] sm:$0xf]
    %v516 = vld [vmem:[#allocation6 + $0x334] sm:$0xff]
    %v517 = vld [vmem:[#allocation6 + $0x33c] sm:$0xff]
    %v518 = vld [vmem:[#allocation6 + $0x344] sm:$0xf]
    %v519 = vld [vmem:[#allocation6 + $0x348] sm:$0xff]
    %v520 = vld [vmem:[#allocation6 + $0x350] sm:$0xff]
    %v521 = vld [vmem:[#allocation6 + $0x358] sm:$0xf]
    %v522 = vld [vmem:[#allocation6 + $0x35c] sm:$0xff]
    %v523 = vld [vmem:[#allocation6 + $0x364] sm:$0xff]
    %v524 = vld [vmem:[#allocation6 + $0x36c] sm:$0xf]
    %v525 = vld [vmem:[#allocation6 + $0x370] sm:$0xff]
    %v526 = vld [vmem:[#allocation6 + $0x378] sm:$0xff]
    %v527 = vld [vmem:[#allocation6 + $0x380] sm:$0xf]
    %v528 = vld [vmem:[#allocation6 + $0x384] sm:$0xff]
    %v529 = vld [vmem:[#allocation6 + $0x38c] sm:$0xff]
    %v530 = vld [vmem:[#allocation6 + $0x394] sm:$0xf]
    %v531 = vld [vmem:[#allocation6 + $0x398] sm:$0xff]
    %v532 = vld [vmem:[#allocation6 + $0x3a0] sm:$0xff]
    %v533 = vld [vmem:[#allocation6 + $0x3a8] sm:$0xf]
    %v534 = vld [vmem:[#allocation6 + $0x3ac] sm:$0xff]
    %v535 = vld [vmem:[#allocation6 + $0x3b4] sm:$0xff]
    %v536 = vld [vmem:[#allocation6 + $0x3bc] sm:$0xf]
    %v537 = vld [vmem:[#allocation6 + $0x3c0] sm:$0xff]
    %v538 = vld [vmem:[#allocation6 + $0x3c8] sm:$0xff]
    %v539 = vld [vmem:[#allocation6 + $0x3d0] sm:$0xf]
    %v540 = vld [vmem:[#allocation6 + $0x3d4] sm:$0xff]
    %v541 = vld [vmem:[#allocation6 + $0x3dc] sm:$0xff]
    %v542 = vld [vmem:[#allocation6 + $0x3e4] sm:$0xf]
    %v543 = vld [vmem:[#allocation6 + $0x3e8] sm:$0xff]
    %v544 = vld [vmem:[#allocation6 + $0x3f0] sm:$0xff]
    %v545 = vld [vmem:[#allocation6 + $0x3f8] sm:$0xf]
    %v546 = vld [vmem:[#allocation6 + $0x3fc] sm:$0xff]
    %v547 = vld [vmem:[#allocation6 + $0x404] sm:$0xff]
    %v548 = vld [vmem:[#allocation6 + $0x40c] sm:$0xf]
    %v549 = vld [vmem:[#allocation6 + $0x410] sm:$0xff]
    %v550 = vld [vmem:[#allocation6 + $0x418] sm:$0xff]
    %v551 = vld [vmem:[#allocation6 + $0x420] sm:$0xf]
    %v552 = vld [vmem:[#allocation6 + $0x424] sm:$0xff]
    %v553 = vld [vmem:[#allocation6 + $0x42c] sm:$0xff]
    %v554 = vld [vmem:[#allocation6 + $0x434] sm:$0xf]
    %v555 = vld [vmem:[#allocation6 + $0x438] sm:$0xff]
    %v556 = vld [vmem:[#allocation6 + $0x440] sm:$0xff]
    %v557 = vld [vmem:[#allocation6 + $0x448] sm:$0xf]
    %v558 = vld [vmem:[#allocation6 + $0x44c] sm:$0xff]
    %v559 = vld [vmem:[#allocation6 + $0x454] sm:$0xff]
    %v560 = vld [vmem:[#allocation6 + $0x45c] sm:$0xf]
    %v561 = vld [vmem:[#allocation6 + $0x460] sm:$0xff]
    %v562 = vld [vmem:[#allocation6 + $0x468] sm:$0xff]
    %v563 = vld [vmem:[#allocation6 + $0x470] sm:$0xf]
    %v564 = vld [vmem:[#allocation6 + $0x474] sm:$0xff]
    %v565 = vld [vmem:[#allocation6 + $0x47c] sm:$0xff]
    %v566 = vld [vmem:[#allocation6 + $0x484] sm:$0xf]
    %v567 = vld [vmem:[#allocation6 + $0x488] sm:$0xff]
    %v568 = vld [vmem:[#allocation6 + $0x490] sm:$0xff]
    %v569 = vld [vmem:[#allocation6 + $0x498] sm:$0xf]
    %v570 = vld [vmem:[#allocation6 + $0x49c] sm:$0xff]
    %v571 = vld [vmem:[#allocation6 + $0x4a4] sm:$0xff]
    %v572 = vld [vmem:[#allocation6 + $0x4ac] sm:$0xf]
    %v573 = vld [vmem:[#allocation6 + $0x4b0] sm:$0xff]
    %v574 = vld [vmem:[#allocation6 + $0x4b8] sm:$0xff]
    %v575 = vld [vmem:[#allocation6 + $0x4c0] sm:$0xf]
    %v576 = vld [vmem:[#allocation6 + $0x4c4] sm:$0xff]
    %v577 = vld [vmem:[#allocation6 + $0x4cc] sm:$0xff]
    %v578 = vld [vmem:[#allocation6 + $0x4d4] sm:$0xf]
    %v579 = vld [vmem:[#allocation6 + $0x4d8] sm:$0xff]
    %v580 = vld [vmem:[#allocation6 + $0x4e0] sm:$0xff]
    %v581 = vld [vmem:[#allocation6 + $0x4e8] sm:$0xf]
    %v582 = vld [vmem:[#allocation6 + $0x4ec] sm:$0xff]
    %v583 = vld [vmem:[#allocation6 + $0x4f4] sm:$0xff]
    %v584 = vld [vmem:[#allocation6 + $0x4fc] sm:$0xf]
    %v585 = vld [vmem:[#allocation6 + $0x500] sm:$0xff]
    %v586 = vld [vmem:[#allocation6 + $0x508] sm:$0xff]
    %v587 = vld [vmem:[#allocation6 + $0x510] sm:$0xf]
    %v588 = vld [vmem:[#allocation6 + $0x514] sm:$0xff]
    %v589 = vld [vmem:[#allocation6 + $0x51c] sm:$0xff]
    %v590 = vld [vmem:[#allocation6 + $0x524] sm:$0xf]
    %v591 = vld [vmem:[#allocation6 + $0x528] sm:$0xff]
    %v592 = vld [vmem:[#allocation6 + $0x530] sm:$0xff]
    %v593 = vld [vmem:[#allocation6 + $0x538] sm:$0xf]
    %v594 = vld [vmem:[#allocation6 + $0x53c] sm:$0xff]
    %v595 = vld [vmem:[#allocation6 + $0x544] sm:$0xff]
    %v596 = vld [vmem:[#allocation6 + $0x54c] sm:$0xf]
    %v597 = vld [vmem:[#allocation6 + $0x550] sm:$0xff]
    %v598 = vld [vmem:[#allocation6 + $0x558] sm:$0xff]
    %v599 = vld [vmem:[#allocation6 + $0x560] sm:$0xf]
    %v600 = vld [vmem:[#allocation6 + $0x564] sm:$0xff]
    %v601 = vld [vmem:[#allocation6 + $0x56c] sm:$0xff]
    %v602 = vld [vmem:[#allocation6 + $0x574] sm:$0xf]
    %v603 = vld [vmem:[#allocation6 + $0x578] sm:$0xff]
    %v604 = vld [vmem:[#allocation6 + $0x580] sm:$0xff]
    %v605 = vld [vmem:[#allocation6 + $0x588] sm:$0xf]
    %v606 = vld [vmem:[#allocation6 + $0x58c] sm:$0xff]
    %v607 = vld [vmem:[#allocation6 + $0x594] sm:$0xff]
    %v608 = vld [vmem:[#allocation6 + $0x59c] sm:$0xf]
    %v609 = vld [vmem:[#allocation6 + $0x5a0] sm:$0xff]
    %v610 = vld [vmem:[#allocation6 + $0x5a8] sm:$0xff]
    %v611 = vld [vmem:[#allocation6 + $0x5b0] sm:$0xf]
    %v612 = vld [vmem:[#allocation6 + $0x5b4] sm:$0xff]
    %v613 = vld [vmem:[#allocation6 + $0x5bc] sm:$0xff]
    %v614 = vld [vmem:[#allocation6 + $0x5c4] sm:$0xf]
    %v615 = vld [vmem:[#allocation6 + $0x5c8] sm:$0xff]
    %v616 = vld [vmem:[#allocation6 + $0x5d0] sm:$0xff]
    %v617 = vld [vmem:[#allocation6 + $0x5d8] sm:$0xf]
    %v618 = vld [vmem:[#allocation6 + $0x5dc] sm:$0xff]
    %v619 = vld [vmem:[#allocation6 + $0x5e4] sm:$0xff]
    %v620 = vld [vmem:[#allocation6 + $0x5ec] sm:$0xf]
    %v621 = vld [vmem:[#allocation6 + $0x5f0] sm:$0xff]
    %v622 = vld [vmem:[#allocation6 + $0x5f8] sm:$0xff]
    %v623 = vld [vmem:[#allocation6 + $0x600] sm:$0xf]
    %v624 = vld [vmem:[#allocation6 + $0x604] sm:$0xff]
    %v625 = vld [vmem:[#allocation6 + $0x60c] sm:$0xff]
    %v626 = vld [vmem:[#allocation6 + $0x614] sm:$0xf]
    %v627 = vld [vmem:[#allocation6 + $0x618] sm:$0xff]
    %v628 = vld [vmem:[#allocation6 + $0x620] sm:$0xff]
    %v629 = vld [vmem:[#allocation6 + $0x628] sm:$0xf]
    %v630 = vld [vmem:[#allocation6 + $0x62c] sm:$0xff]
    %v631 = vld [vmem:[#allocation6 + $0x634] sm:$0xff]
    %v632 = vld [vmem:[#allocation6 + $0x63c] sm:$0xf]
    %v633 = vld [vmem:[#allocation6 + $0x640] sm:$0xff]
    %v634 = vld [vmem:[#allocation6 + $0x648] sm:$0xff]
    %v635 = vld [vmem:[#allocation6 + $0x650] sm:$0xf]
    %v636 = vld [vmem:[#allocation6 + $0x654] sm:$0xff]
    %v637 = vld [vmem:[#allocation6 + $0x65c] sm:$0xff]
    %v638 = vld [vmem:[#allocation6 + $0x664] sm:$0xf]
    %v639 = vld [vmem:[#allocation6 + $0x668] sm:$0xff]
    %v640 = vld [vmem:[#allocation6 + $0x670] sm:$0xff]
    %v641 = vld [vmem:[#allocation6 + $0x678] sm:$0xf]
    %v642 = vld [vmem:[#allocation6 + $0x67c] sm:$0xff]
    %v643 = vld [vmem:[#allocation6 + $0x684] sm:$0xff]
    %v644 = vld [vmem:[#allocation6 + $0x68c] sm:$0xf]
    %v645 = vld [vmem:[#allocation6 + $0x690] sm:$0xff]
    %v646 = vld [vmem:[#allocation6 + $0x698] sm:$0xff]
    %v647 = vld [vmem:[#allocation6 + $0x6a0] sm:$0xf]
    %v648 = vld [vmem:[#allocation6 + $0x6a4] sm:$0xff]
    %v649 = vld [vmem:[#allocation6 + $0x6ac] sm:$0xff]
    %v650 = vld [vmem:[#allocation6 + $0x6b4] sm:$0xf]
    %v651 = vld [vmem:[#allocation6 + $0x6b8] sm:$0xff]
    %v652 = vld [vmem:[#allocation6 + $0x6c0] sm:$0xff]
    %v653 = vld [vmem:[#allocation6 + $0x6c8] sm:$0xf]
    %v654 = vld [vmem:[#allocation6 + $0x6cc] sm:$0xff]
    %v655 = vld [vmem:[#allocation6 + $0x6d4] sm:$0xff]
    %v656 = vld [vmem:[#allocation6 + $0x6dc] sm:$0xf]
    %v657 = vld [vmem:[#allocation6 + $0x6e0] sm:$0xff]
    %v658 = vld [vmem:[#allocation6 + $0x6e8] sm:$0xff]
    %v659 = vld [vmem:[#allocation6 + $0x6f0] sm:$0xf]
    %v660 = vld [vmem:[#allocation6 + $0x6f4] sm:$0xff]
    %v661 = vld [vmem:[#allocation6 + $0x6fc] sm:$0xff]
    %v662 = vld [vmem:[#allocation6 + $0x704] sm:$0xf]
    %v663 = vld [vmem:[#allocation6 + $0x708] sm:$0xff]
    %v664 = vld [vmem:[#allocation6 + $0x710] sm:$0xff]
    %v665 = vld [vmem:[#allocation6 + $0x718] sm:$0xf]
    %v666 = vld [vmem:[#allocation6 + $0x71c] sm:$0xff]
    %v667 = vld [vmem:[#allocation6 + $0x724] sm:$0xff]
    %v668 = vld [vmem:[#allocation6 + $0x72c] sm:$0xf]
    %v669 = vld [vmem:[#allocation6 + $0x730] sm:$0xff]
    %v670 = vld [vmem:[#allocation6 + $0x738] sm:$0xff]
    %v671 = vld [vmem:[#allocation6 + $0x740] sm:$0xf]
    %v672 = vld [vmem:[#allocation6 + $0x744] sm:$0xff]
    %v673 = vld [vmem:[#allocation6 + $0x74c] sm:$0xff]
    %v674 = vld [vmem:[#allocation6 + $0x754] sm:$0xf]
    %v675 = vld [vmem:[#allocation6 + $0x758] sm:$0xff]
    %v676 = vld [vmem:[#allocation6 + $0x760] sm:$0xff]
    %v677 = vld [vmem:[#allocation6 + $0x768] sm:$0xf]
    %v678 = vld [vmem:[#allocation6 + $0x76c] sm:$0xff]
    %v679 = vld [vmem:[#allocation6 + $0x774] sm:$0xff]
    %v680 = vld [vmem:[#allocation6 + $0x77c] sm:$0xf]
    %v681 = vld [vmem:[#allocation6 + $0x780] sm:$0xff]
    %v682 = vld [vmem:[#allocation6 + $0x788] sm:$0xff]
    %v683 = vld [vmem:[#allocation6 + $0x790] sm:$0xf]
    %v684 = vld [vmem:[#allocation6 + $0x794] sm:$0xff]
    %v685 = vld [vmem:[#allocation6 + $0x79c] sm:$0xff]
    %v686 = vld [vmem:[#allocation6 + $0x7a4] sm:$0xf]
    %v687 = vld [vmem:[#allocation6 + $0x7a8] sm:$0xff]
    %v688 = vld [vmem:[#allocation6 + $0x7b0] sm:$0xff]
    %v689 = vld [vmem:[#allocation6 + $0x7b8] sm:$0xf]
    %v690 = vld [vmem:[#allocation6 + $0x7bc] sm:$0xff]
    %v691 = vld [vmem:[#allocation6 + $0x7c4] sm:$0xff]
    %v692 = vld [vmem:[#allocation6 + $0x7cc] sm:$0xf]
    %v693 = vld [vmem:[#allocation6 + $0x7d0] sm:$0xff]
    %v694 = vld [vmem:[#allocation6 + $0x7d8] sm:$0xff]
    %v695 = vld [vmem:[#allocation6 + $0x7e0] sm:$0xf]
    %v696 = vld [vmem:[#allocation6 + $0x7e4] sm:$0xff]
    %v697 = vld [vmem:[#allocation6 + $0x7ec] sm:$0xff]
    %v698 = vld [vmem:[#allocation6 + $0x7f4] sm:$0xf]
    %v699 = vld [vmem:[#allocation6 + $0x7f8] sm:$0xff]
    %v700 = vld [vmem:[#allocation6 + $0x800] sm:$0xff]
    %v701 = vld [vmem:[#allocation6 + $0x808] sm:$0xf]
    %v702 = vld [vmem:[#allocation6 + $0x80c] sm:$0xff]
    %v703 = vld [vmem:[#allocation6 + $0x814] sm:$0xff]
    %v704 = vld [vmem:[#allocation6 + $0x81c] sm:$0xf]
    %v705 = vld [vmem:[#allocation6 + $0x820] sm:$0xff]
    %v706 = vld [vmem:[#allocation6 + $0x828] sm:$0xff]
    %v707 = vld [vmem:[#allocation6 + $0x830] sm:$0xf]
    %v708 = vld [vmem:[#allocation6 + $0x834] sm:$0xff]
    %v709 = vld [vmem:[#allocation6 + $0x83c] sm:$0xff]
    %v710 = vld [vmem:[#allocation6 + $0x844] sm:$0xf]
    %v711 = vld [vmem:[#allocation6 + $0x848] sm:$0xff]
    %v712 = vld [vmem:[#allocation6 + $0x850] sm:$0xff]
    %v713 = vld [vmem:[#allocation6 + $0x858] sm:$0xf]
    %v714 = vld [vmem:[#allocation6 + $0x85c] sm:$0xff]
    %v715 = vld [vmem:[#allocation6 + $0x864] sm:$0xff]
    %v716 = vld [vmem:[#allocation6 + $0x86c] sm:$0xf]
    %v717 = vld [vmem:[#allocation6 + $0x870] sm:$0xff]
    %v718 = vld [vmem:[#allocation6 + $0x878] sm:$0xff]
    %v719 = vld [vmem:[#allocation6 + $0x880] sm:$0xf]
    %v720 = vld [vmem:[#allocation6 + $0x884] sm:$0xff]
    %v721 = vld [vmem:[#allocation6 + $0x88c] sm:$0xff]
    %v722 = vld [vmem:[#allocation6 + $0x894] sm:$0xf]
    %v723 = vld [vmem:[#allocation6 + $0x898] sm:$0xff]
    %v724 = vld [vmem:[#allocation6 + $0x8a0] sm:$0xff]
    %v725 = vld [vmem:[#allocation6 + $0x8a8] sm:$0xf]
    %v726 = vld [vmem:[#allocation6 + $0x8ac] sm:$0xff]
    %v727 = vld [vmem:[#allocation6 + $0x8b4] sm:$0xff]
    %v728 = vld [vmem:[#allocation6 + $0x8bc] sm:$0xf]
    %v729 = vld [vmem:[#allocation7] sm:$0x1f]
    %v731 = vlaneseq
    %v732 = vshrl.u32 %v731, 7
    %v733 = vsub.s32 0, %v732
    %v734 = vrot.slane %v729, %v733
    %v735 = vlaneseq
    %v736 = vshrl.u32 %v735, 7
    %v737 = vsub.s32 1, %v736
    %v738 = vrot.slane %v729, %v737
    %v739 = vlaneseq
    %v740 = vshrl.u32 %v739, 7
    %v741 = vsub.s32 2, %v740
    %v742 = vrot.slane %v729, %v741
    %v743 = vlaneseq
    %v744 = vshrl.u32 %v743, 7
    %v745 = vsub.s32 3, %v744
    %v746 = vrot.slane %v729, %v745
    %v747 = vlaneseq
    %v748 = vshrl.u32 %v747, 7
    %v749 = vsub.s32 4, %v748
    %v750 = vrot.slane %v729, %v749
    %v1092 = vunpack.c.l.b16 %v393
    %v1093 = vunpack.c.h.b16 %v393
    %v1094 = vunpack.c.l.b16 %v394
    %v1095 = vunpack.c.h.b16 %v394
    %v1096 = vunpack.c.l.b16 %v395
    %v1097 = vunpack.c.l.b16 %v396
    %v1098 = vunpack.c.h.b16 %v396
    %v1099 = vunpack.c.l.b16 %v397
    %v1100 = vunpack.c.h.b16 %v397
    %v1101 = vunpack.c.l.b16 %v398
    %v1102 = vunpack.c.l.b16 %v399
    %v1103 = vunpack.c.h.b16 %v399
    %v1104 = vunpack.c.l.b16 %v400
    %v1105 = vunpack.c.h.b16 %v400
    %v1106 = vunpack.c.l.b16 %v401
    %v1107 = vunpack.c.l.b16 %v402
    %v1108 = vunpack.c.h.b16 %v402
    %v1109 = vunpack.c.l.b16 %v403
    %v1110 = vunpack.c.h.b16 %v403
    %v1111 = vunpack.c.l.b16 %v404
    %v1112 = vunpack.c.l.b16 %v405
    %v1113 = vunpack.c.h.b16 %v405
    %v1114 = vunpack.c.l.b16 %v406
    %v1115 = vunpack.c.h.b16 %v406
    %v1116 = vunpack.c.l.b16 %v407
    %v1117 = vunpack.c.l.b16 %v408
    %v1118 = vunpack.c.h.b16 %v408
    %v1119 = vunpack.c.l.b16 %v409
    %v1120 = vunpack.c.h.b16 %v409
    %v1121 = vunpack.c.l.b16 %v410
    %v1122 = vunpack.c.l.b16 %v411
    %v1123 = vunpack.c.h.b16 %v411
    %v1124 = vunpack.c.l.b16 %v412
    %v1125 = vunpack.c.h.b16 %v412
    %v1126 = vunpack.c.l.b16 %v413
    %v1127 = vunpack.c.l.b16 %v414
    %v1128 = vunpack.c.h.b16 %v414
    %v1129 = vunpack.c.l.b16 %v415
    %v1130 = vunpack.c.h.b16 %v415
    %v1131 = vunpack.c.l.b16 %v416
    %v1132 = vunpack.c.l.b16 %v417
    %v1133 = vunpack.c.h.b16 %v417
    %v1134 = vunpack.c.l.b16 %v418
    %v1135 = vunpack.c.h.b16 %v418
    %v1136 = vunpack.c.l.b16 %v419
    %v1137 = vunpack.c.l.b16 %v420
    %v1138 = vunpack.c.h.b16 %v420
    %v1139 = vunpack.c.l.b16 %v421
    %v1140 = vunpack.c.h.b16 %v421
    %v1141 = vunpack.c.l.b16 %v422
    %v1142 = vunpack.c.l.b16 %v423
    %v1143 = vunpack.c.h.b16 %v423
    %v1144 = vunpack.c.l.b16 %v424
    %v1145 = vunpack.c.h.b16 %v424
    %v1146 = vunpack.c.l.b16 %v425
    %v1147 = vunpack.c.l.b16 %v426
    %v1148 = vunpack.c.h.b16 %v426
    %v1149 = vunpack.c.l.b16 %v427
    %v1150 = vunpack.c.h.b16 %v427
    %v1151 = vunpack.c.l.b16 %v428
    %v1152 = vunpack.c.l.b16 %v429
    %v1153 = vunpack.c.h.b16 %v429
    %v1154 = vunpack.c.l.b16 %v430
    %v1155 = vunpack.c.h.b16 %v430
    %v1156 = vunpack.c.l.b16 %v431
    %v1157 = vunpack.c.l.b16 %v432
    %v1158 = vunpack.c.h.b16 %v432
    %v1159 = vunpack.c.l.b16 %v433
    %v1160 = vunpack.c.h.b16 %v433
    %v1161 = vunpack.c.l.b16 %v434
    %v1162 = vunpack.c.l.b16 %v435
    %v1163 = vunpack.c.h.b16 %v435
    %v1164 = vunpack.c.l.b16 %v436
    %v1165 = vunpack.c.h.b16 %v436
    %v1166 = vunpack.c.l.b16 %v437
    %v1167 = vunpack.c.l.b16 %v438
    %v1168 = vunpack.c.h.b16 %v438
    %v1169 = vunpack.c.l.b16 %v439
    %v1170 = vunpack.c.h.b16 %v439
    %v1171 = vunpack.c.l.b16 %v440
    %v1172 = vunpack.c.l.b16 %v441
    %v1173 = vunpack.c.h.b16 %v441
    %v1174 = vunpack.c.l.b16 %v442
    %v1175 = vunpack.c.h.b16 %v442
    %v1176 = vunpack.c.l.b16 %v443
    %v1177 = vunpack.c.l.b16 %v444
    %v1178 = vunpack.c.h.b16 %v444
    %v1179 = vunpack.c.l.b16 %v445
    %v1180 = vunpack.c.h.b16 %v445
    %v1181 = vunpack.c.l.b16 %v446
    %v1182 = vunpack.c.l.b16 %v447
    %v1183 = vunpack.c.h.b16 %v447
    %v1184 = vunpack.c.l.b16 %v448
    %v1185 = vunpack.c.h.b16 %v448
    %v1186 = vunpack.c.l.b16 %v449
    %v1187 = vunpack.c.l.b16 %v450
    %v1188 = vunpack.c.h.b16 %v450
    %v1189 = vunpack.c.l.b16 %v451
    %v1190 = vunpack.c.h.b16 %v451
    %v1191 = vunpack.c.l.b16 %v452
    %v1192 = vunpack.c.l.b16 %v453
    %v1193 = vunpack.c.h.b16 %v453
    %v1194 = vunpack.c.l.b16 %v454
    %v1195 = vunpack.c.h.b16 %v454
    %v1196 = vunpack.c.l.b16 %v455
    %v1197 = vunpack.c.l.b16 %v456
    %v1198 = vunpack.c.h.b16 %v456
    %v1199 = vunpack.c.l.b16 %v457
    %v1200 = vunpack.c.h.b16 %v457
    %v1201 = vunpack.c.l.b16 %v458
    %v1202 = vunpack.c.l.b16 %v459
    %v1203 = vunpack.c.h.b16 %v459
    %v1204 = vunpack.c.l.b16 %v460
    %v1205 = vunpack.c.h.b16 %v460
    %v1206 = vunpack.c.l.b16 %v461
    %v1207 = vunpack.c.l.b16 %v462
    %v1208 = vunpack.c.h.b16 %v462
    %v1209 = vunpack.c.l.b16 %v463
    %v1210 = vunpack.c.h.b16 %v463
    %v1211 = vunpack.c.l.b16 %v464
    %v1212 = vunpack.c.l.b16 %v465
    %v1213 = vunpack.c.h.b16 %v465
    %v1214 = vunpack.c.l.b16 %v466
    %v1215 = vunpack.c.h.b16 %v466
    %v1216 = vunpack.c.l.b16 %v467
    %v1217 = vunpack.c.l.b16 %v468
    %v1218 = vunpack.c.h.b16 %v468
    %v1219 = vunpack.c.l.b16 %v469
    %v1220 = vunpack.c.h.b16 %v469
    %v1221 = vunpack.c.l.b16 %v470
    %v1222 = vunpack.c.l.b16 %v471
    %v1223 = vunpack.c.h.b16 %v471
    %v1224 = vunpack.c.l.b16 %v472
    %v1225 = vunpack.c.h.b16 %v472
    %v1226 = vunpack.c.l.b16 %v473
    %v1227 = vunpack.c.l.b16 %v474
    %v1228 = vunpack.c.h.b16 %v474
    %v1229 = vunpack.c.l.b16 %v475
    %v1230 = vunpack.c.h.b16 %v475
    %v1231 = vunpack.c.l.b16 %v476
    %v1232 = vunpack.c.l.b16 %v477
    %v1233 = vunpack.c.h.b16 %v477
    %v1234 = vunpack.c.l.b16 %v478
    %v1235 = vunpack.c.h.b16 %v478
    %v1236 = vunpack.c.l.b16 %v479
    %v1237 = vunpack.c.l.b16 %v480
    %v1238 = vunpack.c.h.b16 %v480
    %v1239 = vunpack.c.l.b16 %v481
    %v1240 = vunpack.c.h.b16 %v481
    %v1241 = vunpack.c.l.b16 %v482
    %v1242 = vunpack.c.l.b16 %v483
    %v1243 = vunpack.c.h.b16 %v483
    %v1244 = vunpack.c.l.b16 %v484
    %v1245 = vunpack.c.h.b16 %v484
    %v1246 = vunpack.c.l.b16 %v485
    %v1247 = vunpack.c.l.b16 %v486
    %v1248 = vunpack.c.h.b16 %v486
    %v1249 = vunpack.c.l.b16 %v487
    %v1250 = vunpack.c.h.b16 %v487
    %v1251 = vunpack.c.l.b16 %v488
    %v1252 = vunpack.c.l.b16 %v489
    %v1253 = vunpack.c.h.b16 %v489
    %v1254 = vunpack.c.l.b16 %v490
    %v1255 = vunpack.c.h.b16 %v490
    %v1256 = vunpack.c.l.b16 %v491
    %v1257 = vunpack.c.l.b16 %v492
    %v1258 = vunpack.c.h.b16 %v492
    %v1259 = vunpack.c.l.b16 %v493
    %v1260 = vunpack.c.h.b16 %v493
    %v1261 = vunpack.c.l.b16 %v494
    %v1262 = vunpack.c.l.b16 %v495
    %v1263 = vunpack.c.h.b16 %v495
    %v1264 = vunpack.c.l.b16 %v496
    %v1265 = vunpack.c.h.b16 %v496
    %v1266 = vunpack.c.l.b16 %v497
    %v1267 = vunpack.c.l.b16 %v498
    %v1268 = vunpack.c.h.b16 %v498
    %v1269 = vunpack.c.l.b16 %v499
    %v1270 = vunpack.c.h.b16 %v499
    %v1271 = vunpack.c.l.b16 %v500
    %v1272 = vunpack.c.l.b16 %v501
    %v1273 = vunpack.c.h.b16 %v501
    %v1274 = vunpack.c.l.b16 %v502
    %v1275 = vunpack.c.h.b16 %v502
    %v1276 = vunpack.c.l.b16 %v503
    %v1277 = vunpack.c.l.b16 %v504
    %v1278 = vunpack.c.h.b16 %v504
    %v1279 = vunpack.c.l.b16 %v505
    %v1280 = vunpack.c.h.b16 %v505
    %v1281 = vunpack.c.l.b16 %v506
    %v1282 = vunpack.c.l.b16 %v507
    %v1283 = vunpack.c.h.b16 %v507
    %v1284 = vunpack.c.l.b16 %v508
    %v1285 = vunpack.c.h.b16 %v508
    %v1286 = vunpack.c.l.b16 %v509
    %v1287 = vunpack.c.l.b16 %v510
    %v1288 = vunpack.c.h.b16 %v510
    %v1289 = vunpack.c.l.b16 %v511
    %v1290 = vunpack.c.h.b16 %v511
    %v1291 = vunpack.c.l.b16 %v512
    %v1292 = vunpack.c.l.b16 %v513
    %v1293 = vunpack.c.h.b16 %v513
    %v1294 = vunpack.c.l.b16 %v514
    %v1295 = vunpack.c.h.b16 %v514
    %v1296 = vunpack.c.l.b16 %v515
    %v1297 = vunpack.c.l.b16 %v516
    %v1298 = vunpack.c.h.b16 %v516
    %v1299 = vunpack.c.l.b16 %v517
    %v1300 = vunpack.c.h.b16 %v517
    %v1301 = vunpack.c.l.b16 %v518
    %v1302 = vunpack.c.l.b16 %v519
    %v1303 = vunpack.c.h.b16 %v519
    %v1304 = vunpack.c.l.b16 %v520
    %v1305 = vunpack.c.h.b16 %v520
    %v1306 = vunpack.c.l.b16 %v521
    %v1307 = vunpack.c.l.b16 %v522
    %v1308 = vunpack.c.h.b16 %v522
    %v1309 = vunpack.c.l.b16 %v523
    %v1310 = vunpack.c.h.b16 %v523
    %v1311 = vunpack.c.l.b16 %v524
    %v1312 = vunpack.c.l.b16 %v525
    %v1313 = vunpack.c.h.b16 %v525
    %v1314 = vunpack.c.l.b16 %v526
    %v1315 = vunpack.c.h.b16 %v526
    %v1316 = vunpack.c.l.b16 %v527
    %v1317 = vunpack.c.l.b16 %v528
    %v1318 = vunpack.c.h.b16 %v528
    %v1319 = vunpack.c.l.b16 %v529
    %v1320 = vunpack.c.h.b16 %v529
    %v1321 = vunpack.c.l.b16 %v530
    %v1322 = vunpack.c.l.b16 %v531
    %v1323 = vunpack.c.h.b16 %v531
    %v1324 = vunpack.c.l.b16 %v532
    %v1325 = vunpack.c.h.b16 %v532
    %v1326 = vunpack.c.l.b16 %v533
    %v1327 = vunpack.c.l.b16 %v534
    %v1328 = vunpack.c.h.b16 %v534
    %v1329 = vunpack.c.l.b16 %v535
    %v1330 = vunpack.c.h.b16 %v535
    %v1331 = vunpack.c.l.b16 %v536
    %v1332 = vunpack.c.l.b16 %v537
    %v1333 = vunpack.c.h.b16 %v537
    %v1334 = vunpack.c.l.b16 %v538
    %v1335 = vunpack.c.h.b16 %v538
    %v1336 = vunpack.c.l.b16 %v539
    %v1337 = vunpack.c.l.b16 %v540
    %v1338 = vunpack.c.h.b16 %v540
    %v1339 = vunpack.c.l.b16 %v541
    %v1340 = vunpack.c.h.b16 %v541
    %v1341 = vunpack.c.l.b16 %v542
    %v1342 = vunpack.c.l.b16 %v543
    %v1343 = vunpack.c.h.b16 %v543
    %v1344 = vunpack.c.l.b16 %v544
    %v1345 = vunpack.c.h.b16 %v544
    %v1346 = vunpack.c.l.b16 %v545
    %v1347 = vunpack.c.l.b16 %v546
    %v1348 = vunpack.c.h.b16 %v546
    %v1349 = vunpack.c.l.b16 %v547
    %v1350 = vunpack.c.h.b16 %v547
    %v1351 = vunpack.c.l.b16 %v548
    %v1352 = vunpack.c.l.b16 %v549
    %v1353 = vunpack.c.h.b16 %v549
    %v1354 = vunpack.c.l.b16 %v550
    %v1355 = vunpack.c.h.b16 %v550
    %v1356 = vunpack.c.l.b16 %v551
    %v1357 = vunpack.c.l.b16 %v552
    %v1358 = vunpack.c.h.b16 %v552
    %v1359 = vunpack.c.l.b16 %v553
    %v1360 = vunpack.c.h.b16 %v553
    %v1361 = vunpack.c.l.b16 %v554
    %v1362 = vunpack.c.l.b16 %v555
    %v1363 = vunpack.c.h.b16 %v555
    %v1364 = vunpack.c.l.b16 %v556
    %v1365 = vunpack.c.h.b16 %v556
    %v1366 = vunpack.c.l.b16 %v557
    %v1367 = vunpack.c.l.b16 %v558
    %v1368 = vunpack.c.h.b16 %v558
    %v1369 = vunpack.c.l.b16 %v559
    %v1370 = vunpack.c.h.b16 %v559
    %v1371 = vunpack.c.l.b16 %v560
    %v1372 = vunpack.c.l.b16 %v561
    %v1373 = vunpack.c.h.b16 %v561
    %v1374 = vunpack.c.l.b16 %v562
    %v1375 = vunpack.c.h.b16 %v562
    %v1376 = vunpack.c.l.b16 %v563
    %v1377 = vunpack.c.l.b16 %v564
    %v1378 = vunpack.c.h.b16 %v564
    %v1379 = vunpack.c.l.b16 %v565
    %v1380 = vunpack.c.h.b16 %v565
    %v1381 = vunpack.c.l.b16 %v566
    %v1382 = vunpack.c.l.b16 %v567
    %v1383 = vunpack.c.h.b16 %v567
    %v1384 = vunpack.c.l.b16 %v568
    %v1385 = vunpack.c.h.b16 %v568
    %v1386 = vunpack.c.l.b16 %v569
    %v1387 = vunpack.c.l.b16 %v570
    %v1388 = vunpack.c.h.b16 %v570
    %v1389 = vunpack.c.l.b16 %v571
    %v1390 = vunpack.c.h.b16 %v571
    %v1391 = vunpack.c.l.b16 %v572
    %v1392 = vunpack.c.l.b16 %v573
    %v1393 = vunpack.c.h.b16 %v573
    %v1394 = vunpack.c.l.b16 %v574
    %v1395 = vunpack.c.h.b16 %v574
    %v1396 = vunpack.c.l.b16 %v575
    %v1397 = vunpack.c.l.b16 %v576
    %v1398 = vunpack.c.h.b16 %v576
    %v1399 = vunpack.c.l.b16 %v577
    %v1400 = vunpack.c.h.b16 %v577
    %v1401 = vunpack.c.l.b16 %v578
    %v1402 = vunpack.c.l.b16 %v579
    %v1403 = vunpack.c.h.b16 %v579
    %v1404 = vunpack.c.l.b16 %v580
    %v1405 = vunpack.c.h.b16 %v580
    %v1406 = vunpack.c.l.b16 %v581
    %v1407 = vunpack.c.l.b16 %v582
    %v1408 = vunpack.c.h.b16 %v582
    %v1409 = vunpack.c.l.b16 %v583
    %v1410 = vunpack.c.h.b16 %v583
    %v1411 = vunpack.c.l.b16 %v584
    %v1412 = vunpack.c.l.b16 %v585
    %v1413 = vunpack.c.h.b16 %v585
    %v1414 = vunpack.c.l.b16 %v586
    %v1415 = vunpack.c.h.b16 %v586
    %v1416 = vunpack.c.l.b16 %v587
    %v1417 = vunpack.c.l.b16 %v588
    %v1418 = vunpack.c.h.b16 %v588
    %v1419 = vunpack.c.l.b16 %v589
    %v1420 = vunpack.c.h.b16 %v589
    %v1421 = vunpack.c.l.b16 %v590
    %v1422 = vunpack.c.l.b16 %v591
    %v1423 = vunpack.c.h.b16 %v591
    %v1424 = vunpack.c.l.b16 %v592
    %v1425 = vunpack.c.h.b16 %v592
    %v1426 = vunpack.c.l.b16 %v593
    %v1427 = vunpack.c.l.b16 %v594
    %v1428 = vunpack.c.h.b16 %v594
    %v1429 = vunpack.c.l.b16 %v595
    %v1430 = vunpack.c.h.b16 %v595
    %v1431 = vunpack.c.l.b16 %v596
    %v1432 = vunpack.c.l.b16 %v597
    %v1433 = vunpack.c.h.b16 %v597
    %v1434 = vunpack.c.l.b16 %v598
    %v1435 = vunpack.c.h.b16 %v598
    %v1436 = vunpack.c.l.b16 %v599
    %v1437 = vunpack.c.l.b16 %v600
    %v1438 = vunpack.c.h.b16 %v600
    %v1439 = vunpack.c.l.b16 %v601
    %v1440 = vunpack.c.h.b16 %v601
    %v1441 = vunpack.c.l.b16 %v602
    %v1442 = vunpack.c.l.b16 %v603
    %v1443 = vunpack.c.h.b16 %v603
    %v1444 = vunpack.c.l.b16 %v604
    %v1445 = vunpack.c.h.b16 %v604
    %v1446 = vunpack.c.l.b16 %v605
    %v1447 = vunpack.c.l.b16 %v606
    %v1448 = vunpack.c.h.b16 %v606
    %v1449 = vunpack.c.l.b16 %v607
    %v1450 = vunpack.c.h.b16 %v607
    %v1451 = vunpack.c.l.b16 %v608
    %v1452 = vunpack.c.l.b16 %v609
    %v1453 = vunpack.c.h.b16 %v609
    %v1454 = vunpack.c.l.b16 %v610
    %v1455 = vunpack.c.h.b16 %v610
    %v1456 = vunpack.c.l.b16 %v611
    %v1457 = vunpack.c.l.b16 %v612
    %v1458 = vunpack.c.h.b16 %v612
    %v1459 = vunpack.c.l.b16 %v613
    %v1460 = vunpack.c.h.b16 %v613
    %v1461 = vunpack.c.l.b16 %v614
    %v1462 = vunpack.c.l.b16 %v615
    %v1463 = vunpack.c.h.b16 %v615
    %v1464 = vunpack.c.l.b16 %v616
    %v1465 = vunpack.c.h.b16 %v616
    %v1466 = vunpack.c.l.b16 %v617
    %v1467 = vunpack.c.l.b16 %v618
    %v1468 = vunpack.c.h.b16 %v618
    %v1469 = vunpack.c.l.b16 %v619
    %v1470 = vunpack.c.h.b16 %v619
    %v1471 = vunpack.c.l.b16 %v620
    %v1472 = vunpack.c.l.b16 %v621
    %v1473 = vunpack.c.h.b16 %v621
    %v1474 = vunpack.c.l.b16 %v622
    %v1475 = vunpack.c.h.b16 %v622
    %v1476 = vunpack.c.l.b16 %v623
    %v1477 = vunpack.c.l.b16 %v624
    %v1478 = vunpack.c.h.b16 %v624
    %v1479 = vunpack.c.l.b16 %v625
    %v1480 = vunpack.c.h.b16 %v625
    %v1481 = vunpack.c.l.b16 %v626
    %v1482 = vunpack.c.l.b16 %v627
    %v1483 = vunpack.c.h.b16 %v627
    %v1484 = vunpack.c.l.b16 %v628
    %v1485 = vunpack.c.h.b16 %v628
    %v1486 = vunpack.c.l.b16 %v629
    %v1487 = vunpack.c.l.b16 %v630
    %v1488 = vunpack.c.h.b16 %v630
    %v1489 = vunpack.c.l.b16 %v631
    %v1490 = vunpack.c.h.b16 %v631
    %v1491 = vunpack.c.l.b16 %v632
    %v1492 = vunpack.c.l.b16 %v633
    %v1493 = vunpack.c.h.b16 %v633
    %v1494 = vunpack.c.l.b16 %v634
    %v1495 = vunpack.c.h.b16 %v634
    %v1496 = vunpack.c.l.b16 %v635
    %v1497 = vunpack.c.l.b16 %v636
    %v1498 = vunpack.c.h.b16 %v636
    %v1499 = vunpack.c.l.b16 %v637
    %v1500 = vunpack.c.h.b16 %v637
    %v1501 = vunpack.c.l.b16 %v638
    %v1502 = vunpack.c.l.b16 %v639
    %v1503 = vunpack.c.h.b16 %v639
    %v1504 = vunpack.c.l.b16 %v640
    %v1505 = vunpack.c.h.b16 %v640
    %v1506 = vunpack.c.l.b16 %v641
    %v1507 = vunpack.c.l.b16 %v642
    %v1508 = vunpack.c.h.b16 %v642
    %v1509 = vunpack.c.l.b16 %v643
    %v1510 = vunpack.c.h.b16 %v643
    %v1511 = vunpack.c.l.b16 %v644
    %v1512 = vunpack.c.l.b16 %v645
    %v1513 = vunpack.c.h.b16 %v645
    %v1514 = vunpack.c.l.b16 %v646
    %v1515 = vunpack.c.h.b16 %v646
    %v1516 = vunpack.c.l.b16 %v647
    %v1517 = vunpack.c.l.b16 %v648
    %v1518 = vunpack.c.h.b16 %v648
    %v1519 = vunpack.c.l.b16 %v649
    %v1520 = vunpack.c.h.b16 %v649
    %v1521 = vunpack.c.l.b16 %v650
    %v1522 = vunpack.c.l.b16 %v651
    %v1523 = vunpack.c.h.b16 %v651
    %v1524 = vunpack.c.l.b16 %v652
    %v1525 = vunpack.c.h.b16 %v652
    %v1526 = vunpack.c.l.b16 %v653
    %v1527 = vunpack.c.l.b16 %v654
    %v1528 = vunpack.c.h.b16 %v654
    %v1529 = vunpack.c.l.b16 %v655
    %v1530 = vunpack.c.h.b16 %v655
    %v1531 = vunpack.c.l.b16 %v656
    %v1532 = vunpack.c.l.b16 %v657
    %v1533 = vunpack.c.h.b16 %v657
    %v1534 = vunpack.c.l.b16 %v658
    %v1535 = vunpack.c.h.b16 %v658
    %v1536 = vunpack.c.l.b16 %v659
    %v1537 = vunpack.c.l.b16 %v660
    %v1538 = vunpack.c.h.b16 %v660
    %v1539 = vunpack.c.l.b16 %v661
    %v1540 = vunpack.c.h.b16 %v661
    %v1541 = vunpack.c.l.b16 %v662
    %v1542 = vunpack.c.l.b16 %v663
    %v1543 = vunpack.c.h.b16 %v663
    %v1544 = vunpack.c.l.b16 %v664
    %v1545 = vunpack.c.h.b16 %v664
    %v1546 = vunpack.c.l.b16 %v665
    %v1547 = vunpack.c.l.b16 %v666
    %v1548 = vunpack.c.h.b16 %v666
    %v1549 = vunpack.c.l.b16 %v667
    %v1550 = vunpack.c.h.b16 %v667
    %v1551 = vunpack.c.l.b16 %v668
    %v1552 = vunpack.c.l.b16 %v669
    %v1553 = vunpack.c.h.b16 %v669
    %v1554 = vunpack.c.l.b16 %v670
    %v1555 = vunpack.c.h.b16 %v670
    %v1556 = vunpack.c.l.b16 %v671
    %v1557 = vunpack.c.l.b16 %v672
    %v1558 = vunpack.c.h.b16 %v672
    %v1559 = vunpack.c.l.b16 %v673
    %v1560 = vunpack.c.h.b16 %v673
    %v1561 = vunpack.c.l.b16 %v674
    %v1562 = vunpack.c.l.b16 %v675
    %v1563 = vunpack.c.h.b16 %v675
    %v1564 = vunpack.c.l.b16 %v676
    %v1565 = vunpack.c.h.b16 %v676
    %v1566 = vunpack.c.l.b16 %v677
    %v1567 = vunpack.c.l.b16 %v678
    %v1568 = vunpack.c.h.b16 %v678
    %v1569 = vunpack.c.l.b16 %v679
    %v1570 = vunpack.c.h.b16 %v679
    %v1571 = vunpack.c.l.b16 %v680
    %v1572 = vunpack.c.l.b16 %v681
    %v1573 = vunpack.c.h.b16 %v681
    %v1574 = vunpack.c.l.b16 %v682
    %v1575 = vunpack.c.h.b16 %v682
    %v1576 = vunpack.c.l.b16 %v683
    %v1577 = vunpack.c.l.b16 %v684
    %v1578 = vunpack.c.h.b16 %v684
    %v1579 = vunpack.c.l.b16 %v685
    %v1580 = vunpack.c.h.b16 %v685
    %v1581 = vunpack.c.l.b16 %v686
    %v1582 = vunpack.c.l.b16 %v687
    %v1583 = vunpack.c.h.b16 %v687
    %v1584 = vunpack.c.l.b16 %v688
    %v1585 = vunpack.c.h.b16 %v688
    %v1586 = vunpack.c.l.b16 %v689
    %v1587 = vunpack.c.l.b16 %v690
    %v1588 = vunpack.c.h.b16 %v690
    %v1589 = vunpack.c.l.b16 %v691
    %v1590 = vunpack.c.h.b16 %v691
    %v1591 = vunpack.c.l.b16 %v692
    %v1592 = vunpack.c.l.b16 %v693
    %v1593 = vunpack.c.h.b16 %v693
    %v1594 = vunpack.c.l.b16 %v694
    %v1595 = vunpack.c.h.b16 %v694
    %v1596 = vunpack.c.l.b16 %v695
    %v1597 = vunpack.c.l.b16 %v696
    %v1598 = vunpack.c.h.b16 %v696
    %v1599 = vunpack.c.l.b16 %v697
    %v1600 = vunpack.c.h.b16 %v697
    %v1601 = vunpack.c.l.b16 %v698
    %v1602 = vunpack.c.l.b16 %v699
    %v1603 = vunpack.c.h.b16 %v699
    %v1604 = vunpack.c.l.b16 %v700
    %v1605 = vunpack.c.h.b16 %v700
    %v1606 = vunpack.c.l.b16 %v701
    %v1607 = vunpack.c.l.b16 %v702
    %v1608 = vunpack.c.h.b16 %v702
    %v1609 = vunpack.c.l.b16 %v703
    %v1610 = vunpack.c.h.b16 %v703
    %v1611 = vunpack.c.l.b16 %v704
    %v1612 = vunpack.c.l.b16 %v705
    %v1613 = vunpack.c.h.b16 %v705
    %v1614 = vunpack.c.l.b16 %v706
    %v1615 = vunpack.c.h.b16 %v706
    %v1616 = vunpack.c.l.b16 %v707
    %v1617 = vunpack.c.l.b16 %v708
    %v1618 = vunpack.c.h.b16 %v708
    %v1619 = vunpack.c.l.b16 %v709
    %v1620 = vunpack.c.h.b16 %v709
    %v1621 = vunpack.c.l.b16 %v710
    %v1622 = vunpack.c.l.b16 %v711
    %v1623 = vunpack.c.h.b16 %v711
    %v1624 = vunpack.c.l.b16 %v712
    %v1625 = vunpack.c.h.b16 %v712
    %v1626 = vunpack.c.l.b16 %v713
    %v1627 = vunpack.c.l.b16 %v714
    %v1628 = vunpack.c.h.b16 %v714
    %v1629 = vunpack.c.l.b16 %v715
    %v1630 = vunpack.c.h.b16 %v715
    %v1631 = vunpack.c.l.b16 %v716
    %v1632 = vunpack.c.l.b16 %v717
    %v1633 = vunpack.c.h.b16 %v717
    %v1634 = vunpack.c.l.b16 %v718
    %v1635 = vunpack.c.h.b16 %v718
    %v1636 = vunpack.c.l.b16 %v719
    %v1637 = vunpack.c.l.b16 %v720
    %v1638 = vunpack.c.h.b16 %v720
    %v1639 = vunpack.c.l.b16 %v721
    %v1640 = vunpack.c.h.b16 %v721
    %v1641 = vunpack.c.l.b16 %v722
    %v1642 = vunpack.c.l.b16 %v723
    %v1643 = vunpack.c.h.b16 %v723
    %v1644 = vunpack.c.l.b16 %v724
    %v1645 = vunpack.c.h.b16 %v724
    %v1646 = vunpack.c.l.b16 %v725
    %v1647 = vunpack.c.l.b16 %v726
    %v1648 = vunpack.c.h.b16 %v726
    %v1649 = vunpack.c.l.b16 %v727
    %v1650 = vunpack.c.h.b16 %v727
    %v1651 = vunpack.c.l.b16 %v728
    %v1652 = vpack.c.b16 %v1097, %v1092
    %v1653 = vpack.c.b16 %v1098, %v1093
    %v1654 = vpack.c.b16 %v1099, %v1094
    %v1655 = vpack.c.b16 %v1100, %v1095
    %v1656 = vpack.c.b16 %v1101, %v1096
    %v1657 = vpack.c.b16 %v1107, %v1102
    %v1658 = vpack.c.b16 %v1108, %v1103
    %v1659 = vpack.c.b16 %v1109, %v1104
    %v1660 = vpack.c.b16 %v1110, %v1105
    %v1661 = vpack.c.b16 %v1111, %v1106
    %v1662 = vpack.c.b16 %v1117, %v1112
    %v1663 = vpack.c.b16 %v1118, %v1113
    %v1664 = vpack.c.b16 %v1119, %v1114
    %v1665 = vpack.c.b16 %v1120, %v1115
    %v1666 = vpack.c.b16 %v1121, %v1116
    %v1667 = vpack.c.b16 %v1127, %v1122
    %v1668 = vpack.c.b16 %v1128, %v1123
    %v1669 = vpack.c.b16 %v1129, %v1124
    %v1670 = vpack.c.b16 %v1130, %v1125
    %v1671 = vpack.c.b16 %v1131, %v1126
    %v1672 = vpack.c.b16 %v1137, %v1132
    %v1673 = vpack.c.b16 %v1138, %v1133
    %v1674 = vpack.c.b16 %v1139, %v1134
    %v1675 = vpack.c.b16 %v1140, %v1135
    %v1676 = vpack.c.b16 %v1141, %v1136
    %v1677 = vpack.c.b16 %v1147, %v1142
    %v1678 = vpack.c.b16 %v1148, %v1143
    %v1679 = vpack.c.b16 %v1149, %v1144
    %v1680 = vpack.c.b16 %v1150, %v1145
    %v1681 = vpack.c.b16 %v1151, %v1146
    %v1682 = vpack.c.b16 %v1157, %v1152
    %v1683 = vpack.c.b16 %v1158, %v1153
    %v1684 = vpack.c.b16 %v1159, %v1154
    %v1685 = vpack.c.b16 %v1160, %v1155
    %v1686 = vpack.c.b16 %v1161, %v1156
    %v1687 = vpack.c.b16 %v1167, %v1162
    %v1688 = vpack.c.b16 %v1168, %v1163
    %v1689 = vpack.c.b16 %v1169, %v1164
    %v1690 = vpack.c.b16 %v1170, %v1165
    %v1691 = vpack.c.b16 %v1171, %v1166
    %v1692 = vpack.c.b16 %v1177, %v1172
    %v1693 = vpack.c.b16 %v1178, %v1173
    %v1694 = vpack.c.b16 %v1179, %v1174
    %v1695 = vpack.c.b16 %v1180, %v1175
    %v1696 = vpack.c.b16 %v1181, %v1176
    %v1697 = vpack.c.b16 %v1187, %v1182
    %v1698 = vpack.c.b16 %v1188, %v1183
    %v1699 = vpack.c.b16 %v1189, %v1184
    %v1700 = vpack.c.b16 %v1190, %v1185
    %v1701 = vpack.c.b16 %v1191, %v1186
    %v1702 = vpack.c.b16 %v1197, %v1192
    %v1703 = vpack.c.b16 %v1198, %v1193
    %v1704 = vpack.c.b16 %v1199, %v1194
    %v1705 = vpack.c.b16 %v1200, %v1195
    %v1706 = vpack.c.b16 %v1201, %v1196
    %v1707 = vpack.c.b16 %v1207, %v1202
    %v1708 = vpack.c.b16 %v1208, %v1203
    %v1709 = vpack.c.b16 %v1209, %v1204
    %v1710 = vpack.c.b16 %v1210, %v1205
    %v1711 = vpack.c.b16 %v1211, %v1206
    %v1712 = vpack.c.b16 %v1217, %v1212
    %v1713 = vpack.c.b16 %v1218, %v1213
    %v1714 = vpack.c.b16 %v1219, %v1214
    %v1715 = vpack.c.b16 %v1220, %v1215
    %v1716 = vpack.c.b16 %v1221, %v1216
    %v1717 = vpack.c.b16 %v1227, %v1222
    %v1718 = vpack.c.b16 %v1228, %v1223
    %v1719 = vpack.c.b16 %v1229, %v1224
    %v1720 = vpack.c.b16 %v1230, %v1225
    %v1721 = vpack.c.b16 %v1231, %v1226
    %v1722 = vpack.c.b16 %v1237, %v1232
    %v1723 = vpack.c.b16 %v1238, %v1233
    %v1724 = vpack.c.b16 %v1239, %v1234
    %v1725 = vpack.c.b16 %v1240, %v1235
    %v1726 = vpack.c.b16 %v1241, %v1236
    %v1727 = vpack.c.b16 %v1247, %v1242
    %v1728 = vpack.c.b16 %v1248, %v1243
    %v1729 = vpack.c.b16 %v1249, %v1244
    %v1730 = vpack.c.b16 %v1250, %v1245
    %v1731 = vpack.c.b16 %v1251, %v1246
    %v1732 = vpack.c.b16 %v1257, %v1252
    %v1733 = vpack.c.b16 %v1258, %v1253
    %v1734 = vpack.c.b16 %v1259, %v1254
    %v1735 = vpack.c.b16 %v1260, %v1255
    %v1736 = vpack.c.b16 %v1261, %v1256
    %v1737 = vpack.c.b16 %v1267, %v1262
    %v1738 = vpack.c.b16 %v1268, %v1263
    %v1739 = vpack.c.b16 %v1269, %v1264
    %v1740 = vpack.c.b16 %v1270, %v1265
    %v1741 = vpack.c.b16 %v1271, %v1266
    %v1742 = vpack.c.b16 %v1277, %v1272
    %v1743 = vpack.c.b16 %v1278, %v1273
    %v1744 = vpack.c.b16 %v1279, %v1274
    %v1745 = vpack.c.b16 %v1280, %v1275
    %v1746 = vpack.c.b16 %v1281, %v1276
    %v1747 = vpack.c.b16 %v1287, %v1282
    %v1748 = vpack.c.b16 %v1288, %v1283
    %v1749 = vpack.c.b16 %v1289, %v1284
    %v1750 = vpack.c.b16 %v1290, %v1285
    %v1751 = vpack.c.b16 %v1291, %v1286
    %v1752 = vpack.c.b16 %v1297, %v1292
    %v1753 = vpack.c.b16 %v1298, %v1293
    %v1754 = vpack.c.b16 %v1299, %v1294
    %v1755 = vpack.c.b16 %v1300, %v1295
    %v1756 = vpack.c.b16 %v1301, %v1296
    %v1757 = vpack.c.b16 %v1307, %v1302
    %v1758 = vpack.c.b16 %v1308, %v1303
    %v1759 = vpack.c.b16 %v1309, %v1304
    %v1760 = vpack.c.b16 %v1310, %v1305
    %v1761 = vpack.c.b16 %v1311, %v1306
    %v1762 = vpack.c.b16 %v1317, %v1312
    %v1763 = vpack.c.b16 %v1318, %v1313
    %v1764 = vpack.c.b16 %v1319, %v1314
    %v1765 = vpack.c.b16 %v1320, %v1315
    %v1766 = vpack.c.b16 %v1321, %v1316
    %v1767 = vpack.c.b16 %v1327, %v1322
    %v1768 = vpack.c.b16 %v1328, %v1323
    %v1769 = vpack.c.b16 %v1329, %v1324
    %v1770 = vpack.c.b16 %v1330, %v1325
    %v1771 = vpack.c.b16 %v1331, %v1326
    %v1772 = vpack.c.b16 %v1337, %v1332
    %v1773 = vpack.c.b16 %v1338, %v1333
    %v1774 = vpack.c.b16 %v1339, %v1334
    %v1775 = vpack.c.b16 %v1340, %v1335
    %v1776 = vpack.c.b16 %v1341, %v1336
    %v1777 = vpack.c.b16 %v1347, %v1342
    %v1778 = vpack.c.b16 %v1348, %v1343
    %v1779 = vpack.c.b16 %v1349, %v1344
    %v1780 = vpack.c.b16 %v1350, %v1345
    %v1781 = vpack.c.b16 %v1351, %v1346
    %v1782 = vpack.c.b16 %v1357, %v1352
    %v1783 = vpack.c.b16 %v1358, %v1353
    %v1784 = vpack.c.b16 %v1359, %v1354
    %v1785 = vpack.c.b16 %v1360, %v1355
    %v1786 = vpack.c.b16 %v1361, %v1356
    %v1787 = vpack.c.b16 %v1367, %v1362
    %v1788 = vpack.c.b16 %v1368, %v1363
    %v1789 = vpack.c.b16 %v1369, %v1364
    %v1790 = vpack.c.b16 %v1370, %v1365
    %v1791 = vpack.c.b16 %v1371, %v1366
    %v1792 = vpack.c.b16 %v1377, %v1372
    %v1793 = vpack.c.b16 %v1378, %v1373
    %v1794 = vpack.c.b16 %v1379, %v1374
    %v1795 = vpack.c.b16 %v1380, %v1375
    %v1796 = vpack.c.b16 %v1381, %v1376
    %v1797 = vpack.c.b16 %v1387, %v1382
    %v1798 = vpack.c.b16 %v1388, %v1383
    %v1799 = vpack.c.b16 %v1389, %v1384
    %v1800 = vpack.c.b16 %v1390, %v1385
    %v1801 = vpack.c.b16 %v1391, %v1386
    %v1802 = vpack.c.b16 %v1397, %v1392
    %v1803 = vpack.c.b16 %v1398, %v1393
    %v1804 = vpack.c.b16 %v1399, %v1394
    %v1805 = vpack.c.b16 %v1400, %v1395
    %v1806 = vpack.c.b16 %v1401, %v1396
    %v1807 = vpack.c.b16 %v1407, %v1402
    %v1808 = vpack.c.b16 %v1408, %v1403
    %v1809 = vpack.c.b16 %v1409, %v1404
    %v1810 = vpack.c.b16 %v1410, %v1405
    %v1811 = vpack.c.b16 %v1411, %v1406
    %v1812 = vpack.c.b16 %v1417, %v1412
    %v1813 = vpack.c.b16 %v1418, %v1413
    %v1814 = vpack.c.b16 %v1419, %v1414
    %v1815 = vpack.c.b16 %v1420, %v1415
    %v1816 = vpack.c.b16 %v1421, %v1416
    %v1817 = vpack.c.b16 %v1427, %v1422
    %v1818 = vpack.c.b16 %v1428, %v1423
    %v1819 = vpack.c.b16 %v1429, %v1424
    %v1820 = vpack.c.b16 %v1430, %v1425
    %v1821 = vpack.c.b16 %v1431, %v1426
    %v1822 = vpack.c.b16 %v1437, %v1432
    %v1823 = vpack.c.b16 %v1438, %v1433
    %v1824 = vpack.c.b16 %v1439, %v1434
    %v1825 = vpack.c.b16 %v1440, %v1435
    %v1826 = vpack.c.b16 %v1441, %v1436
    %v1827 = vpack.c.b16 %v1447, %v1442
    %v1828 = vpack.c.b16 %v1448, %v1443
    %v1829 = vpack.c.b16 %v1449, %v1444
    %v1830 = vpack.c.b16 %v1450, %v1445
    %v1831 = vpack.c.b16 %v1451, %v1446
    %v1832 = vpack.c.b16 %v1457, %v1452
    %v1833 = vpack.c.b16 %v1458, %v1453
    %v1834 = vpack.c.b16 %v1459, %v1454
    %v1835 = vpack.c.b16 %v1460, %v1455
    %v1836 = vpack.c.b16 %v1461, %v1456
    %v1837 = vpack.c.b16 %v1467, %v1462
    %v1838 = vpack.c.b16 %v1468, %v1463
    %v1839 = vpack.c.b16 %v1469, %v1464
    %v1840 = vpack.c.b16 %v1470, %v1465
    %v1841 = vpack.c.b16 %v1471, %v1466
    %v1842 = vpack.c.b16 %v1477, %v1472
    %v1843 = vpack.c.b16 %v1478, %v1473
    %v1844 = vpack.c.b16 %v1479, %v1474
    %v1845 = vpack.c.b16 %v1480, %v1475
    %v1846 = vpack.c.b16 %v1481, %v1476
    %v1847 = vpack.c.b16 %v1487, %v1482
    %v1848 = vpack.c.b16 %v1488, %v1483
    %v1849 = vpack.c.b16 %v1489, %v1484
    %v1850 = vpack.c.b16 %v1490, %v1485
    %v1851 = vpack.c.b16 %v1491, %v1486
    %v1852 = vpack.c.b16 %v1497, %v1492
    %v1853 = vpack.c.b16 %v1498, %v1493
    %v1854 = vpack.c.b16 %v1499, %v1494
    %v1855 = vpack.c.b16 %v1500, %v1495
    %v1856 = vpack.c.b16 %v1501, %v1496
    %v1857 = vpack.c.b16 %v1507, %v1502
    %v1858 = vpack.c.b16 %v1508, %v1503
    %v1859 = vpack.c.b16 %v1509, %v1504
    %v1860 = vpack.c.b16 %v1510, %v1505
    %v1861 = vpack.c.b16 %v1511, %v1506
    %v1862 = vpack.c.b16 %v1517, %v1512
    %v1863 = vpack.c.b16 %v1518, %v1513
    %v1864 = vpack.c.b16 %v1519, %v1514
    %v1865 = vpack.c.b16 %v1520, %v1515
    %v1866 = vpack.c.b16 %v1521, %v1516
    %v1867 = vpack.c.b16 %v1527, %v1522
    %v1868 = vpack.c.b16 %v1528, %v1523
    %v1869 = vpack.c.b16 %v1529, %v1524
    %v1870 = vpack.c.b16 %v1530, %v1525
    %v1871 = vpack.c.b16 %v1531, %v1526
    %v1872 = vpack.c.b16 %v1537, %v1532
    %v1873 = vpack.c.b16 %v1538, %v1533
    %v1874 = vpack.c.b16 %v1539, %v1534
    %v1875 = vpack.c.b16 %v1540, %v1535
    %v1876 = vpack.c.b16 %v1541, %v1536
    %v1877 = vpack.c.b16 %v1547, %v1542
    %v1878 = vpack.c.b16 %v1548, %v1543
    %v1879 = vpack.c.b16 %v1549, %v1544
    %v1880 = vpack.c.b16 %v1550, %v1545
    %v1881 = vpack.c.b16 %v1551, %v1546
    %v1882 = vpack.c.b16 %v1557, %v1552
    %v1883 = vpack.c.b16 %v1558, %v1553
    %v1884 = vpack.c.b16 %v1559, %v1554
    %v1885 = vpack.c.b16 %v1560, %v1555
    %v1886 = vpack.c.b16 %v1561, %v1556
    %v1887 = vpack.c.b16 %v1567, %v1562
    %v1888 = vpack.c.b16 %v1568, %v1563
    %v1889 = vpack.c.b16 %v1569, %v1564
    %v1890 = vpack.c.b16 %v1570, %v1565
    %v1891 = vpack.c.b16 %v1571, %v1566
    %v1892 = vpack.c.b16 %v1577, %v1572
    %v1893 = vpack.c.b16 %v1578, %v1573
    %v1894 = vpack.c.b16 %v1579, %v1574
    %v1895 = vpack.c.b16 %v1580, %v1575
    %v1896 = vpack.c.b16 %v1581, %v1576
    %v1897 = vpack.c.b16 %v1587, %v1582
    %v1898 = vpack.c.b16 %v1588, %v1583
    %v1899 = vpack.c.b16 %v1589, %v1584
    %v1900 = vpack.c.b16 %v1590, %v1585
    %v1901 = vpack.c.b16 %v1591, %v1586
    %v1902 = vpack.c.b16 %v1597, %v1592
    %v1903 = vpack.c.b16 %v1598, %v1593
    %v1904 = vpack.c.b16 %v1599, %v1594
    %v1905 = vpack.c.b16 %v1600, %v1595
    %v1906 = vpack.c.b16 %v1601, %v1596
    %v1907 = vpack.c.b16 %v1607, %v1602
    %v1908 = vpack.c.b16 %v1608, %v1603
    %v1909 = vpack.c.b16 %v1609, %v1604
    %v1910 = vpack.c.b16 %v1610, %v1605
    %v1911 = vpack.c.b16 %v1611, %v1606
    %v1912 = vpack.c.b16 %v1617, %v1612
    %v1913 = vpack.c.b16 %v1618, %v1613
    %v1914 = vpack.c.b16 %v1619, %v1614
    %v1915 = vpack.c.b16 %v1620, %v1615
    %v1916 = vpack.c.b16 %v1621, %v1616
    %v1917 = vpack.c.b16 %v1627, %v1622
    %v1918 = vpack.c.b16 %v1628, %v1623
    %v1919 = vpack.c.b16 %v1629, %v1624
    %v1920 = vpack.c.b16 %v1630, %v1625
    %v1921 = vpack.c.b16 %v1631, %v1626
    %v1922 = vpack.c.b16 %v1637, %v1632
    %v1923 = vpack.c.b16 %v1638, %v1633
    %v1924 = vpack.c.b16 %v1639, %v1634
    %v1925 = vpack.c.b16 %v1640, %v1635
    %v1926 = vpack.c.b16 %v1641, %v1636
    %v1927 = vpack.c.b16 %v1647, %v1642
    %v1928 = vpack.c.b16 %v1648, %v1643
    %v1929 = vpack.c.b16 %v1649, %v1644
    %v1930 = vpack.c.b16 %v1650, %v1645
    %v1931 = vpack.c.b16 %v1651, %v1646
    %2212 = vmatprep.subr.bf16.mxu0 %v1688
    %2213 = vmatpush1.bf16.msra.mxu0 %v1687
    %2214 = vmatprep.subr.bf16.mxu0 %v1683
    %2215 = vmatpush1.bf16.msra.mxu0 %v1682
    %2216 = vmatprep.subr.bf16.mxu0 %v1678
    %2217 = vmatpush1.bf16.msra.mxu0 %v1677
    %2218 = vmatprep.subr.bf16.mxu0 %v1673
    %2219 = vmatpush1.bf16.msra.mxu0 %v1672
    %2220 = vmatprep.subr.bf16.mxu0 %v1668
    %2221 = vmatpush1.bf16.msra.mxu0 %v1667
    %2222 = vmatprep.subr.bf16.mxu0 %v1663
    %2223 = vmatpush1.bf16.msra.mxu0 %v1662
    %2224 = vmatprep.subr.bf16.mxu0 %v1658
    %2225 = vmatpush1.bf16.msra.mxu0 %v1657
    %2226 = vmatprep.subr.bf16.mxu0 %v1653
    %2227 = vmatpush1.bf16.msra.mxu0 %v1652
    %2228 = vmatprep.subr.bf16.mxu0 %v1728
    %2229 = vmatpush2.bf16.msra.mxu0 %v1727
    %2230 = vmatprep.subr.bf16.mxu0 %v1723
    %2231 = vmatpush2.bf16.msra.mxu0 %v1722
    %2232 = vmatprep.subr.bf16.mxu0 %v1718
    %2233 = vmatpush2.bf16.msra.mxu0 %v1717
    %2234 = vmatprep.subr.bf16.mxu0 %v1713
    %2235 = vmatpush2.bf16.msra.mxu0 %v1712
    %2236 = vmatprep.subr.bf16.mxu0 %v1708
    %2237 = vmatpush2.bf16.msra.mxu0 %v1707
    %2238 = vmatprep.subr.bf16.mxu0 %v1703
    %2239 = vmatpush2.bf16.msra.mxu0 %v1702
    %2240 = vmatprep.subr.bf16.mxu0 %v1698
    %2241 = vmatpush2.bf16.msra.mxu0 %v1697
    %2242 = vmatprep.subr.bf16.mxu0 %v1693
    %2243 = vmatpush2.bf16.msra.mxu0 %v1692
    %2244 = vmatprep.mubr.bf16.mxu0 %v387
    %2245 = vmatmul.mubr.bf16.gmra.mxu0 %v386
    %v2246 = vpop.f32.mrf.mxu0
    %v2247 = vadd.f32 %v734, %v2246
    %v2248 = vpop.f32.mrf.mxu0
    %v2249 = vadd.f32 %v738, %v2248
    %v2250 = vpop.f32.mrf.mxu0
    %v2251 = vpop.f32.mrf.mxu0
    %2252 = vdwg.mxu0
    %2253 = vmatprep.subr.bf16.mxu0 %v1768
    %2254 = vmatpush1.bf16.msra.mxu0 %v1767
    %2255 = vmatprep.subr.bf16.mxu0 %v1763
    %2256 = vmatpush1.bf16.msra.mxu0 %v1762
    %2257 = vmatprep.subr.bf16.mxu0 %v1758
    %2258 = vmatpush1.bf16.msra.mxu0 %v1757
    %2259 = vmatprep.subr.bf16.mxu0 %v1753
    %2260 = vmatpush1.bf16.msra.mxu0 %v1752
    %2261 = vmatprep.subr.bf16.mxu0 %v1748
    %2262 = vmatpush1.bf16.msra.mxu0 %v1747
    %2263 = vmatprep.subr.bf16.mxu0 %v1743
    %2264 = vmatpush1.bf16.msra.mxu0 %v1742
    %2265 = vmatprep.subr.bf16.mxu0 %v1738
    %2266 = vmatpush1.bf16.msra.mxu0 %v1737
    %2267 = vmatprep.subr.bf16.mxu0 %v1733
    %2268 = vmatpush1.bf16.msra.mxu0 %v1732
    %2269 = vmatprep.subr.bf16.mxu0 %v1808
    %2270 = vmatpush2.bf16.msra.mxu0 %v1807
    %2271 = vmatprep.subr.bf16.mxu0 %v1803
    %2272 = vmatpush2.bf16.msra.mxu0 %v1802
    %2273 = vmatprep.subr.bf16.mxu0 %v1798
    %2274 = vmatpush2.bf16.msra.mxu0 %v1797
    %2275 = vmatprep.subr.bf16.mxu0 %v1793
    %2276 = vmatpush2.bf16.msra.mxu0 %v1792
    %2277 = vmatprep.subr.bf16.mxu0 %v1788
    %2278 = vmatpush2.bf16.msra.mxu0 %v1787
    %2279 = vmatprep.subr.bf16.mxu0 %v1783
    %2280 = vmatpush2.bf16.msra.mxu0 %v1782
    %2281 = vmatprep.subr.bf16.mxu0 %v1778
    %2282 = vmatpush2.bf16.msra.mxu0 %v1777
    %2283 = vmatprep.subr.bf16.mxu0 %v1773
    %2284 = vmatpush2.bf16.msra.mxu0 %v1772
    %2285 = vmatprep.mubr.bf16.mxu0 %v389
    %2286 = vmatmul.mubr.bf16.gmra.mxu0 %v388
    %v2287 = vpop.f32.mrf.mxu0
    %v2288 = vadd.f32 %v2247, %v2287
    %v2289 = vpop.f32.mrf.mxu0
    %v2290 = vadd.f32 %v2249, %v2289
    %v2291 = vpop.f32.mrf.mxu0
    %v2292 = vpop.f32.mrf.mxu0
    %2293 = vdwg.mxu0
    %2294 = vmatprep.subr.bf16.mxu0 %v1848
    %2295 = vmatpush1.bf16.msra.mxu0 %v1847
    %2296 = vmatprep.subr.bf16.mxu0 %v1843
    %2297 = vmatpush1.bf16.msra.mxu0 %v1842
    %2298 = vmatprep.subr.bf16.mxu0 %v1838
    %2299 = vmatpush1.bf16.msra.mxu0 %v1837
    %2300 = vmatprep.subr.bf16.mxu0 %v1833
    %2301 = vmatpush1.bf16.msra.mxu0 %v1832
    %2302 = vmatprep.subr.bf16.mxu0 %v1828
    %2303 = vmatpush1.bf16.msra.mxu0 %v1827
    %2304 = vmatprep.subr.bf16.mxu0 %v1823
    %2305 = vmatpush1.bf16.msra.mxu0 %v1822
    %2306 = vmatprep.subr.bf16.mxu0 %v1818
    %2307 = vmatpush1.bf16.msra.mxu0 %v1817
    %2308 = vmatprep.subr.bf16.mxu0 %v1813
    %2309 = vmatpush1.bf16.msra.mxu0 %v1812
    %2310 = vmatprep.subr.bf16.mxu0 %v1888
    %2311 = vmatpush2.bf16.msra.mxu0 %v1887
    %2312 = vmatprep.subr.bf16.mxu0 %v1883
    %2313 = vmatpush2.bf16.msra.mxu0 %v1882
    %2314 = vmatprep.subr.bf16.mxu0 %v1878
    %2315 = vmatpush2.bf16.msra.mxu0 %v1877
    %2316 = vmatprep.subr.bf16.mxu0 %v1873
    %2317 = vmatpush2.bf16.msra.mxu0 %v1872
    %2318 = vmatprep.subr.bf16.mxu0 %v1868
    %2319 = vmatpush2.bf16.msra.mxu0 %v1867
    %2320 = vmatprep.subr.bf16.mxu0 %v1863
    %2321 = vmatpush2.bf16.msra.mxu0 %v1862
    %2322 = vmatprep.subr.bf16.mxu0 %v1858
    %2323 = vmatpush2.bf16.msra.mxu0 %v1857
    %2324 = vmatprep.subr.bf16.mxu0 %v1853
    %2325 = vmatpush2.bf16.msra.mxu0 %v1852
    %2326 = vmatprep.mubr.bf16.mxu0 %v391
    %2327 = vmatmul.mubr.bf16.gmra.mxu0 %v390
    %v2328 = vpop.f32.mrf.mxu0
    %v2329 = vadd.f32 %v2288, %v2328
    %v2330 = vpop.f32.mrf.mxu0
    %v2331 = vadd.f32 %v2290, %v2330
    %v2332 = vpop.f32.mrf.mxu0
    %v2333 = vpop.f32.mrf.mxu0
    %2334 = vdwg.mxu0
    %2335 = vmatprep.subr.bf16.mxu0 %v1928
    %2336 = vmatpush1.bf16.msra.mxu0 %v1927
    %2337 = vmatprep.subr.bf16.mxu0 %v1923
    %2338 = vmatpush1.bf16.msra.mxu0 %v1922
    %2339 = vmatprep.subr.bf16.mxu0 %v1918
    %2340 = vmatpush1.bf16.msra.mxu0 %v1917
    %2341 = vmatprep.subr.bf16.mxu0 %v1913
    %2342 = vmatpush1.bf16.msra.mxu0 %v1912
    %2343 = vmatprep.subr.bf16.mxu0 %v1908
    %2344 = vmatpush1.bf16.msra.mxu0 %v1907
    %2345 = vmatprep.subr.bf16.mxu0 %v1903
    %2346 = vmatpush1.bf16.msra.mxu0 %v1902
    %2347 = vmatprep.subr.bf16.mxu0 %v1898
    %2348 = vmatpush1.bf16.msra.mxu0 %v1897
    %2349 = vmatprep.subr.bf16.mxu0 %v1893
    %2350 = vmatpush1.bf16.msra.mxu0 %v1892
    %2351 = vmatprep.subr.bf16.mxu0 0
    %2352 = vmatpush2.bf16.msra.mxu0 0
    %2353 = vmatprep.subr.bf16.mxu0 0
    %2354 = vmatpush2.bf16.msra.mxu0 0
    %2355 = vmatprep.subr.bf16.mxu0 0
    %2356 = vmatpush2.bf16.msra.mxu0 0
    %2357 = vmatprep.subr.bf16.mxu0 0
    %2358 = vmatpush2.bf16.msra.mxu0 0
    %2359 = vmatprep.subr.bf16.mxu0 0
    %2360 = vmatpush2.bf16.msra.mxu0 0
    %2361 = vmatprep.subr.bf16.mxu0 0
    %2362 = vmatpush2.bf16.msra.mxu0 0
    %2363 = vmatprep.subr.bf16.mxu0 0
    %2364 = vmatpush2.bf16.msra.mxu0 0
    %2365 = vmatprep.subr.bf16.mxu0 0
    %2366 = vmatpush2.bf16.msra.mxu0 0
    %2367 = vmatprep.mubr.bf16.mxu0 0
    %2368 = vmatmul.mubr.bf16.gmra.mxu0 %v392
    %v2369 = vpop.f32.mrf.mxu0
    %v2370 = vadd.f32 %v2329, %v2369
    %v2371 = vpop.f32.mrf.mxu0
    %v2372 = vadd.f32 %v2331, %v2371
    %v2373 = vpop.f32.mrf.mxu0
    %v2374 = vpop.f32.mrf.mxu0
    %2375 = vdwg.mxu0
    %2376 = vmatprep.subr.bf16.mxu0 %v1690
    %2377 = vmatpush1.bf16.msra.mxu0 %v1689
    %2378 = vmatprep.subr.bf16.mxu0 %v1685
    %2379 = vmatpush1.bf16.msra.mxu0 %v1684
    %2380 = vmatprep.subr.bf16.mxu0 %v1680
    %2381 = vmatpush1.bf16.msra.mxu0 %v1679
    %2382 = vmatprep.subr.bf16.mxu0 %v1675
    %2383 = vmatpush1.bf16.msra.mxu0 %v1674
    %2384 = vmatprep.subr.bf16.mxu0 %v1670
    %2385 = vmatpush1.bf16.msra.mxu0 %v1669
    %2386 = vmatprep.subr.bf16.mxu0 %v1665
    %2387 = vmatpush1.bf16.msra.mxu0 %v1664
    %2388 = vmatprep.subr.bf16.mxu0 %v1660
    %2389 = vmatpush1.bf16.msra.mxu0 %v1659
    %2390 = vmatprep.subr.bf16.mxu0 %v1655
    %2391 = vmatpush1.bf16.msra.mxu0 %v1654
    %2392 = vmatprep.subr.bf16.mxu0 %v1730
    %2393 = vmatpush2.bf16.msra.mxu0 %v1729
    %2394 = vmatprep.subr.bf16.mxu0 %v1725
    %2395 = vmatpush2.bf16.msra.mxu0 %v1724
    %2396 = vmatprep.subr.bf16.mxu0 %v1720
    %2397 = vmatpush2.bf16.msra.mxu0 %v1719
    %2398 = vmatprep.subr.bf16.mxu0 %v1715
    %2399 = vmatpush2.bf16.msra.mxu0 %v1714
    %2400 = vmatprep.subr.bf16.mxu0 %v1710
    %2401 = vmatpush2.bf16.msra.mxu0 %v1709
    %2402 = vmatprep.subr.bf16.mxu0 %v1705
    %2403 = vmatpush2.bf16.msra.mxu0 %v1704
    %2404 = vmatprep.subr.bf16.mxu0 %v1700
    %2405 = vmatpush2.bf16.msra.mxu0 %v1699
    %2406 = vmatprep.subr.bf16.mxu0 %v1695
    %2407 = vmatpush2.bf16.msra.mxu0 %v1694
    %2408 = vmatprep.mubr.bf16.mxu0 %v387
    %2409 = vmatmul.mubr.bf16.gmra.mxu0 %v386
    %v2410 = vpop.f32.mrf.mxu0
    %v2411 = vadd.f32 %v742, %v2410
    %v2412 = vpop.f32.mrf.mxu0
    %v2413 = vadd.f32 %v746, %v2412
    %v2414 = vpop.f32.mrf.mxu0
    %v2415 = vpop.f32.mrf.mxu0
    %2416 = vdwg.mxu0
    %2417 = vmatprep.subr.bf16.mxu0 %v1770
    %2418 = vmatpush1.bf16.msra.mxu0 %v1769
    %2419 = vmatprep.subr.bf16.mxu0 %v1765
    %2420 = vmatpush1.bf16.msra.mxu0 %v1764
    %2421 = vmatprep.subr.bf16.mxu0 %v1760
    %2422 = vmatpush1.bf16.msra.mxu0 %v1759
    %2423 = vmatprep.subr.bf16.mxu0 %v1755
    %2424 = vmatpush1.bf16.msra.mxu0 %v1754
    %2425 = vmatprep.subr.bf16.mxu0 %v1750
    %2426 = vmatpush1.bf16.msra.mxu0 %v1749
    %2427 = vmatprep.subr.bf16.mxu0 %v1745
    %2428 = vmatpush1.bf16.msra.mxu0 %v1744
    %2429 = vmatprep.subr.bf16.mxu0 %v1740
    %2430 = vmatpush1.bf16.msra.mxu0 %v1739
    %2431 = vmatprep.subr.bf16.mxu0 %v1735
    %2432 = vmatpush1.bf16.msra.mxu0 %v1734
    %2433 = vmatprep.subr.bf16.mxu0 %v1810
    %2434 = vmatpush2.bf16.msra.mxu0 %v1809
    %2435 = vmatprep.subr.bf16.mxu0 %v1805
    %2436 = vmatpush2.bf16.msra.mxu0 %v1804
    %2437 = vmatprep.subr.bf16.mxu0 %v1800
    %2438 = vmatpush2.bf16.msra.mxu0 %v1799
    %2439 = vmatprep.subr.bf16.mxu0 %v1795
    %2440 = vmatpush2.bf16.msra.mxu0 %v1794
    %2441 = vmatprep.subr.bf16.mxu0 %v1790
    %2442 = vmatpush2.bf16.msra.mxu0 %v1789
    %2443 = vmatprep.subr.bf16.mxu0 %v1785
    %2444 = vmatpush2.bf16.msra.mxu0 %v1784
    %2445 = vmatprep.subr.bf16.mxu0 %v1780
    %2446 = vmatpush2.bf16.msra.mxu0 %v1779
    %2447 = vmatprep.subr.bf16.mxu0 %v1775
    %2448 = vmatpush2.bf16.msra.mxu0 %v1774
    %2449 = vmatprep.mubr.bf16.mxu0 %v389
    %2450 = vmatmul.mubr.bf16.gmra.mxu0 %v388
    %v2451 = vpop.f32.mrf.mxu0
    %v2452 = vadd.f32 %v2411, %v2451
    %v2453 = vpop.f32.mrf.mxu0
    %v2454 = vadd.f32 %v2413, %v2453
    %v2455 = vpop.f32.mrf.mxu0
    %v2456 = vpop.f32.mrf.mxu0
    %2457 = vdwg.mxu0
    %2458 = vmatprep.subr.bf16.mxu0 %v1850
    %2459 = vmatpush1.bf16.msra.mxu0 %v1849
    %2460 = vmatprep.subr.bf16.mxu0 %v1845
    %2461 = vmatpush1.bf16.msra.mxu0 %v1844
    %2462 = vmatprep.subr.bf16.mxu0 %v1840
    %2463 = vmatpush1.bf16.msra.mxu0 %v1839
    %2464 = vmatprep.subr.bf16.mxu0 %v1835
    %2465 = vmatpush1.bf16.msra.mxu0 %v1834
    %2466 = vmatprep.subr.bf16.mxu0 %v1830
    %2467 = vmatpush1.bf16.msra.mxu0 %v1829
    %2468 = vmatprep.subr.bf16.mxu0 %v1825
    %2469 = vmatpush1.bf16.msra.mxu0 %v1824
    %2470 = vmatprep.subr.bf16.mxu0 %v1820
    %2471 = vmatpush1.bf16.msra.mxu0 %v1819
    %2472 = vmatprep.subr.bf16.mxu0 %v1815
    %2473 = vmatpush1.bf16.msra.mxu0 %v1814
    %2474 = vmatprep.subr.bf16.mxu0 %v1890
    %2475 = vmatpush2.bf16.msra.mxu0 %v1889
    %2476 = vmatprep.subr.bf16.mxu0 %v1885
    %2477 = vmatpush2.bf16.msra.mxu0 %v1884
    %2478 = vmatprep.subr.bf16.mxu0 %v1880
    %2479 = vmatpush2.bf16.msra.mxu0 %v1879
    %2480 = vmatprep.subr.bf16.mxu0 %v1875
    %2481 = vmatpush2.bf16.msra.mxu0 %v1874
    %2482 = vmatprep.subr.bf16.mxu0 %v1870
    %2483 = vmatpush2.bf16.msra.mxu0 %v1869
    %2484 = vmatprep.subr.bf16.mxu0 %v1865
    %2485 = vmatpush2.bf16.msra.mxu0 %v1864
    %2486 = vmatprep.subr.bf16.mxu0 %v1860
    %2487 = vmatpush2.bf16.msra.mxu0 %v1859
    %2488 = vmatprep.subr.bf16.mxu0 %v1855
    %2489 = vmatpush2.bf16.msra.mxu0 %v1854
    %2490 = vmatprep.mubr.bf16.mxu0 %v391
    %2491 = vmatmul.mubr.bf16.gmra.mxu0 %v390
    %v2492 = vpop.f32.mrf.mxu0
    %v2493 = vadd.f32 %v2452, %v2492
    %v2494 = vpop.f32.mrf.mxu0
    %v2495 = vadd.f32 %v2454, %v2494
    %v2496 = vpop.f32.mrf.mxu0
    %v2497 = vpop.f32.mrf.mxu0
    %2498 = vdwg.mxu0
    %2499 = vmatprep.subr.bf16.mxu0 %v1930
    %2500 = vmatpush1.bf16.msra.mxu0 %v1929
    %2501 = vmatprep.subr.bf16.mxu0 %v1925
    %2502 = vmatpush1.bf16.msra.mxu0 %v1924
    %2503 = vmatprep.subr.bf16.mxu0 %v1920
    %2504 = vmatpush1.bf16.msra.mxu0 %v1919
    %2505 = vmatprep.subr.bf16.mxu0 %v1915
    %2506 = vmatpush1.bf16.msra.mxu0 %v1914
    %2507 = vmatprep.subr.bf16.mxu0 %v1910
    %2508 = vmatpush1.bf16.msra.mxu0 %v1909
    %2509 = vmatprep.subr.bf16.mxu0 %v1905
    %2510 = vmatpush1.bf16.msra.mxu0 %v1904
    %2511 = vmatprep.subr.bf16.mxu0 %v1900
    %2512 = vmatpush1.bf16.msra.mxu0 %v1899
    %2513 = vmatprep.subr.bf16.mxu0 %v1895
    %2514 = vmatpush1.bf16.msra.mxu0 %v1894
    %2515 = vmatprep.subr.bf16.mxu0 0
    %2516 = vmatpush2.bf16.msra.mxu0 0
    %2517 = vmatprep.subr.bf16.mxu0 0
    %2518 = vmatpush2.bf16.msra.mxu0 0
    %2519 = vmatprep.subr.bf16.mxu0 0
    %2520 = vmatpush2.bf16.msra.mxu0 0
    %2521 = vmatprep.subr.bf16.mxu0 0
    %2522 = vmatpush2.bf16.msra.mxu0 0
    %2523 = vmatprep.subr.bf16.mxu0 0
    %2524 = vmatpush2.bf16.msra.mxu0 0
    %2525 = vmatprep.subr.bf16.mxu0 0
    %2526 = vmatpush2.bf16.msra.mxu0 0
    %2527 = vmatprep.subr.bf16.mxu0 0
    %2528 = vmatpush2.bf16.msra.mxu0 0
    %2529 = vmatprep.subr.bf16.mxu0 0
    %2530 = vmatpush2.bf16.msra.mxu0 0
    %2531 = vmatprep.mubr.bf16.mxu0 0
    %2532 = vmatmul.mubr.bf16.gmra.mxu0 %v392
    %v2533 = vpop.f32.mrf.mxu0
    %v2534 = vadd.f32 %v2493, %v2533
    %v2535 = vpop.f32.mrf.mxu0
    %v2536 = vadd.f32 %v2495, %v2535
    %v2537 = vpop.f32.mrf.mxu0
    %v2538 = vpop.f32.mrf.mxu0
    %2539 = vdwg.mxu0
    %2540 = vmatprep.subr.bf16.mxu0 0
    %2541 = vmatpush1.bf16.msra.mxu0 %v1691
    %2542 = vmatprep.subr.bf16.mxu0 0
    %2543 = vmatpush1.bf16.msra.mxu0 %v1686
    %2544 = vmatprep.subr.bf16.mxu0 0
    %2545 = vmatpush1.bf16.msra.mxu0 %v1681
    %2546 = vmatprep.subr.bf16.mxu0 0
    %2547 = vmatpush1.bf16.msra.mxu0 %v1676
    %2548 = vmatprep.subr.bf16.mxu0 0
    %2549 = vmatpush1.bf16.msra.mxu0 %v1671
    %2550 = vmatprep.subr.bf16.mxu0 0
    %2551 = vmatpush1.bf16.msra.mxu0 %v1666
    %2552 = vmatprep.subr.bf16.mxu0 0
    %2553 = vmatpush1.bf16.msra.mxu0 %v1661
    %2554 = vmatprep.subr.bf16.mxu0 0
    %2555 = vmatpush1.bf16.msra.mxu0 %v1656
    %2556 = vmatprep.subr.bf16.mxu0 0
    %2557 = vmatpush2.bf16.msra.mxu0 %v1731
    %2558 = vmatprep.subr.bf16.mxu0 0
    %2559 = vmatpush2.bf16.msra.mxu0 %v1726
    %2560 = vmatprep.subr.bf16.mxu0 0
    %2561 = vmatpush2.bf16.msra.mxu0 %v1721
    %2562 = vmatprep.subr.bf16.mxu0 0
    %2563 = vmatpush2.bf16.msra.mxu0 %v1716
    %2564 = vmatprep.subr.bf16.mxu0 0
    %2565 = vmatpush2.bf16.msra.mxu0 %v1711
    %2566 = vmatprep.subr.bf16.mxu0 0
    %2567 = vmatpush2.bf16.msra.mxu0 %v1706
    %2568 = vmatprep.subr.bf16.mxu0 0
    %2569 = vmatpush2.bf16.msra.mxu0 %v1701
    %2570 = vmatprep.subr.bf16.mxu0 0
    %2571 = vmatpush2.bf16.msra.mxu0 %v1696
    %2572 = vmatprep.mubr.bf16.mxu0 %v387
    %2573 = vmatmul.mubr.bf16.gmra.mxu0 %v386
    %v2574 = vpop.f32.mrf.mxu0
    %v2575 = vadd.f32 %v750, %v2574
    %v2576 = vpop.f32.mrf.mxu0
    %v2577 = vpop.f32.mrf.mxu0
    %v2578 = vpop.f32.mrf.mxu0
    %2579 = vdwg.mxu0
    %2580 = vmatprep.subr.bf16.mxu0 0
    %2581 = vmatpush1.bf16.msra.mxu0 %v1771
    %2582 = vmatprep.subr.bf16.mxu0 0
    %2583 = vmatpush1.bf16.msra.mxu0 %v1766
    %2584 = vmatprep.subr.bf16.mxu0 0
    %2585 = vmatpush1.bf16.msra.mxu0 %v1761
    %2586 = vmatprep.subr.bf16.mxu0 0
    %2587 = vmatpush1.bf16.msra.mxu0 %v1756
    %2588 = vmatprep.subr.bf16.mxu0 0
    %2589 = vmatpush1.bf16.msra.mxu0 %v1751
    %2590 = vmatprep.subr.bf16.mxu0 0
    %2591 = vmatpush1.bf16.msra.mxu0 %v1746
    %2592 = vmatprep.subr.bf16.mxu0 0
    %2593 = vmatpush1.bf16.msra.mxu0 %v1741
    %2594 = vmatprep.subr.bf16.mxu0 0
    %2595 = vmatpush1.bf16.msra.mxu0 %v1736
    %2596 = vmatprep.subr.bf16.mxu0 0
    %2597 = vmatpush2.bf16.msra.mxu0 %v1811
    %2598 = vmatprep.subr.bf16.mxu0 0
    %2599 = vmatpush2.bf16.msra.mxu0 %v1806
    %2600 = vmatprep.subr.bf16.mxu0 0
    %2601 = vmatpush2.bf16.msra.mxu0 %v1801
    %2602 = vmatprep.subr.bf16.mxu0 0
    %2603 = vmatpush2.bf16.msra.mxu0 %v1796
    %2604 = vmatprep.subr.bf16.mxu0 0
    %2605 = vmatpush2.bf16.msra.mxu0 %v1791
    %2606 = vmatprep.subr.bf16.mxu0 0
    %2607 = vmatpush2.bf16.msra.mxu0 %v1786
    %2608 = vmatprep.subr.bf16.mxu0 0
    %2609 = vmatpush2.bf16.msra.mxu0 %v1781
    %2610 = vmatprep.subr.bf16.mxu0 0
    %2611 = vmatpush2.bf16.msra.mxu0 %v1776
    %2612 = vmatprep.mubr.bf16.mxu0 %v389
    %2613 = vmatmul.mubr.bf16.gmra.mxu0 %v388
    %v2614 = vpop.f32.mrf.mxu0
    %v2615 = vadd.f32 %v2575, %v2614
    %v2616 = vpop.f32.mrf.mxu0
    %v2617 = vpop.f32.mrf.mxu0
    %v2618 = vpop.f32.mrf.mxu0
    %2619 = vdwg.mxu0
    %2620 = vmatprep.subr.bf16.mxu0 0
    %2621 = vmatpush1.bf16.msra.mxu0 %v1851
    %2622 = vmatprep.subr.bf16.mxu0 0
    %2623 = vmatpush1.bf16.msra.mxu0 %v1846
    %2624 = vmatprep.subr.bf16.mxu0 0
    %2625 = vmatpush1.bf16.msra.mxu0 %v1841
    %2626 = vmatprep.subr.bf16.mxu0 0
    %2627 = vmatpush1.bf16.msra.mxu0 %v1836
    %2628 = vmatprep.subr.bf16.mxu0 0
    %2629 = vmatpush1.bf16.msra.mxu0 %v1831
    %2630 = vmatprep.subr.bf16.mxu0 0
    %2631 = vmatpush1.bf16.msra.mxu0 %v1826
    %2632 = vmatprep.subr.bf16.mxu0 0
    %2633 = vmatpush1.bf16.msra.mxu0 %v1821
    %2634 = vmatprep.subr.bf16.mxu0 0
    %2635 = vmatpush1.bf16.msra.mxu0 %v1816
    %2636 = vmatprep.subr.bf16.mxu0 0
    %2637 = vmatpush2.bf16.msra.mxu0 %v1891
    %2638 = vmatprep.subr.bf16.mxu0 0
    %2639 = vmatpush2.bf16.msra.mxu0 %v1886
    %2640 = vmatprep.subr.bf16.mxu0 0
    %2641 = vmatpush2.bf16.msra.mxu0 %v1881
    %2642 = vmatprep.subr.bf16.mxu0 0
    %2643 = vmatpush2.bf16.msra.mxu0 %v1876
    %2644 = vmatprep.subr.bf16.mxu0 0
    %2645 = vmatpush2.bf16.msra.mxu0 %v1871
    %2646 = vmatprep.subr.bf16.mxu0 0
    %2647 = vmatpush2.bf16.msra.mxu0 %v1866
    %2648 = vmatprep.subr.bf16.mxu0 0
    %2649 = vmatpush2.bf16.msra.mxu0 %v1861
    %2650 = vmatprep.subr.bf16.mxu0 0
    %2651 = vmatpush2.bf16.msra.mxu0 %v1856
    %2652 = vmatprep.mubr.bf16.mxu0 %v391
    %2653 = vmatmul.mubr.bf16.gmra.mxu0 %v390
    %v2654 = vpop.f32.mrf.mxu0
    %v2655 = vadd.f32 %v2615, %v2654
    %v2656 = vpop.f32.mrf.mxu0
    %v2657 = vpop.f32.mrf.mxu0
    %v2658 = vpop.f32.mrf.mxu0
    %2659 = vdwg.mxu0
    %2660 = vmatprep.subr.bf16.mxu0 0
    %2661 = vmatpush1.bf16.msra.mxu0 %v1931
    %2662 = vmatprep.subr.bf16.mxu0 0
    %2663 = vmatpush1.bf16.msra.mxu0 %v1926
    %2664 = vmatprep.subr.bf16.mxu0 0
    %2665 = vmatpush1.bf16.msra.mxu0 %v1921
    %2666 = vmatprep.subr.bf16.mxu0 0
    %2667 = vmatpush1.bf16.msra.mxu0 %v1916
    %2668 = vmatprep.subr.bf16.mxu0 0
    %2669 = vmatpush1.bf16.msra.mxu0 %v1911
    %2670 = vmatprep.subr.bf16.mxu0 0
    %2671 = vmatpush1.bf16.msra.mxu0 %v1906
    %2672 = vmatprep.subr.bf16.mxu0 0
    %2673 = vmatpush1.bf16.msra.mxu0 %v1901
    %2674 = vmatprep.subr.bf16.mxu0 0
    %2675 = vmatpush1.bf16.msra.mxu0 %v1896
    %2676 = vmatprep.subr.bf16.mxu0 0
    %2677 = vmatpush2.bf16.msra.mxu0 0
    %2678 = vmatprep.subr.bf16.mxu0 0
    %2679 = vmatpush2.bf16.msra.mxu0 0
    %2680 = vmatprep.subr.bf16.mxu0 0
    %2681 = vmatpush2.bf16.msra.mxu0 0
    %2682 = vmatprep.subr.bf16.mxu0 0
    %2683 = vmatpush2.bf16.msra.mxu0 0
    %2684 = vmatprep.subr.bf16.mxu0 0
    %2685 = vmatpush2.bf16.msra.mxu0 0
    %2686 = vmatprep.subr.bf16.mxu0 0
    %2687 = vmatpush2.bf16.msra.mxu0 0
    %2688 = vmatprep.subr.bf16.mxu0 0
    %2689 = vmatpush2.bf16.msra.mxu0 0
    %2690 = vmatprep.subr.bf16.mxu0 0
    %2691 = vmatpush2.bf16.msra.mxu0 0
    %2692 = vmatprep.mubr.bf16.mxu0 0
    %2693 = vmatmul.mubr.bf16.gmra.mxu0 %v392
    %v2694 = vpop.f32.mrf.mxu0
    %v2695 = vadd.f32 %v2655, %v2694
    %v2696 = vpop.f32.mrf.mxu0
    %v2697 = vpop.f32.mrf.mxu0
    %v2698 = vpop.f32.mrf.mxu0
    %2699 = vdwg.mxu0
    %v2700 = vmax.f32 %v2370, 0.0
    %v2701 = vmax.f32 %v2372, 0.0
    %v2702 = vmax.f32 %v2534, 0.0
    %v2703 = vmax.f32 %v2536, 0.0
    %v2704 = vmax.f32 %v2695, 0.0
    %v2705 = vpack.c.bf16 %v2700, %v2700
    %v2706 = vpack.c.bf16 %v2701, %v2701
    %v2707 = vpack.c.bf16 %v2702, %v2702
    %v2708 = vpack.c.bf16 %v2703, %v2703
    %v2709 = vpack.c.bf16 %v2704, %v2704
    %v2710 = vld [vmem:[%s5] sm:$0xf]
    %v2711 = vld [vmem:[%s5 + $0x4] sm:$0xf]
    %v2712 = vld [vmem:[%s5 + $0x8] sm:$0xf]
    %v2713 = vld [vmem:[%s5 + $0xc] sm:$0xf]
    %v2714 = vld [vmem:[%s5 + $0x10] sm:$0xf]
    %v2715 = vld [vmem:[%s5 + $0x14] sm:$0xf]
    %v2716 = vld [vmem:[%s5 + $0x18] sm:$0xf]
    %v2717 = vld [vmem:[%s5 + $0x1c] sm:$0xf]
    %v2718 = vld [vmem:[%s5 + $0x20] sm:$0xf]
    %v2719 = vld [vmem:[%s5 + $0x24] sm:$0xf]
    %v2720 = vld [vmem:[%s5 + $0x28] sm:$0xf]
    %v2721 = vld [vmem:[%s5 + $0x2c] sm:$0xf]
    %v2722 = vld [vmem:[%s5 + $0x30] sm:$0xf]
    %v2723 = vld [vmem:[%s5 + $0x34] sm:$0xf]
    %v2724 = vld [vmem:[%s5 + $0x38] sm:$0xf]
    %v2725 = vld [vmem:[%s5 + $0x3c] sm:$0xf]
    %v2726 = vld [vmem:[%s5 + $0x40] sm:$0xf]
    %v2727 = vld [vmem:[%s5 + $0x44] sm:$0xf]
    %v2728 = vld [vmem:[%s5 + $0x48] sm:$0xf]
    %v2729 = vld [vmem:[%s5 + $0x4c] sm:$0xf]
    %v2730 = vld [vmem:[%s5 + $0x50] sm:$0xf]
    %v2731 = vld [vmem:[%s5 + $0x54] sm:$0xf]
    %v2732 = vld [vmem:[%s5 + $0x58] sm:$0xf]
    %v2733 = vld [vmem:[%s5 + $0x5c] sm:$0xf]
    %v2734 = vld [vmem:[%s5 + $0x60] sm:$0xf]
    %v2735 = vld [vmem:[%s5 + $0x64] sm:$0xf]
    %v2736 = vld [vmem:[%s5 + $0x68] sm:$0xf]
    %v2737 = vld [vmem:[%s5 + $0x6c] sm:$0xf]
    %v2738 = vld [vmem:[%s5 + $0x70] sm:$0xf]
    %v2739 = vld [vmem:[%s5 + $0x74] sm:$0xf]
    %v2740 = vld [vmem:[%s5 + $0x78] sm:$0xf]
    %v2741 = vld [vmem:[%s5 + $0x7c] sm:$0xf]
    %v2742 = vld [vmem:[%s5 + $0x80] sm:$0xf]
    %v2743 = vld [vmem:[%s5 + $0x84] sm:$0xf]
    %v2744 = vld [vmem:[%s5 + $0x88] sm:$0xf]
    %v2745 = vld [vmem:[%s5 + $0x8c] sm:$0xf]
    %v2746 = vld [vmem:[%s5 + $0x90] sm:$0xf]
    %v2747 = vld [vmem:[%s5 + $0x94] sm:$0xf]
    %v2748 = vld [vmem:[%s5 + $0x98] sm:$0xf]
    %v2749 = vld [vmem:[%s5 + $0x9c] sm:$0xf]
    %v2750 = vld [vmem:[%s5 + $0xa0] sm:$0xf]
    %v2751 = vld [vmem:[%s5 + $0xa4] sm:$0xf]
    %v2752 = vld [vmem:[%s5 + $0xa8] sm:$0xf]
    %v2753 = vld [vmem:[%s5 + $0xac] sm:$0xf]
    %v2754 = vld [vmem:[%s5 + $0xb0] sm:$0xf]
    %v2755 = vld [vmem:[%s5 + $0xb4] sm:$0xf]
    %v2756 = vld [vmem:[%s5 + $0xb8] sm:$0xf]
    %v2757 = vld [vmem:[%s5 + $0xbc] sm:$0xf]
    %v2758 = vld [vmem:[%s5 + $0xc0] sm:$0xf]
    %v2759 = vld [vmem:[%s5 + $0xc4] sm:$0xf]
    %v2760 = vld [vmem:[%s5 + $0xc8] sm:$0xf]
    %v2761 = vld [vmem:[%s5 + $0xcc] sm:$0xf]
    %v2762 = vld [vmem:[%s5 + $0xd0] sm:$0xf]
    %v2763 = vld [vmem:[%s5 + $0xd4] sm:$0xf]
    %v2764 = vld [vmem:[%s5 + $0xd8] sm:$0xf]
    %v2765 = vld [vmem:[%s5 + $0xdc] sm:$0xf]
    %v2766 = vld [vmem:[%s5 + $0xe0] sm:$0xf]
    %v2767 = vld [vmem:[%s5 + $0xe4] sm:$0xf]
    %v2768 = vld [vmem:[%s5 + $0xe8] sm:$0xf]
    %v2769 = vld [vmem:[%s5 + $0xec] sm:$0xf]
    %v2770 = vld [vmem:[%s5 + $0xf0] sm:$0xf]
    %v2771 = vld [vmem:[%s5 + $0xf4] sm:$0xf]
    %v2772 = vld [vmem:[%s5 + $0xf8] sm:$0xf]
    %v2773 = vld [vmem:[%s5 + $0xfc] sm:$0xf]
    %v2774 = vld [vmem:[%s5 + $0x100] sm:$0xf]
    %v2775 = vld [vmem:[%s5 + $0x104] sm:$0xf]
    %v2776 = vld [vmem:[%s5 + $0x108] sm:$0xf]
    %v2777 = vld [vmem:[%s5 + $0x10c] sm:$0xf]
    %v2778 = vld [vmem:[%s5 + $0x110] sm:$0xf]
    %v2779 = vld [vmem:[%s5 + $0x114] sm:$0xf]
    %v2780 = vld [vmem:[%s5 + $0x118] sm:$0xf]
    %v2781 = vld [vmem:[%s5 + $0x11c] sm:$0xf]
    %v2782 = vld [vmem:[%s5 + $0x120] sm:$0xf]
    %v2783 = vld [vmem:[%s5 + $0x124] sm:$0xf]
    %v2784 = vld [vmem:[%s5 + $0x128] sm:$0xf]
    %v2785 = vld [vmem:[%s5 + $0x12c] sm:$0xf]
    %v2786 = vld [vmem:[%s5 + $0x130] sm:$0xf]
    %v2787 = vld [vmem:[%s5 + $0x134] sm:$0xf]
    %v2788 = vld [vmem:[%s5 + $0x138] sm:$0xf]
    %v2789 = vld [vmem:[%s5 + $0x13c] sm:$0xf]
    %v2790 = vld [vmem:[#allocation9] sm:$0x1]
    %v2792 = vlaneseq
    %v2793 = vshrl.u32 %v2792, 7
    %v2794 = vsub.s32 0, %v2793
    %v2795 = vrot.slane %v2790, %v2794
    %v2877 = vunpack.c.l.b16 %v2710
    %v2878 = vunpack.c.l.b16 %v2711
    %v2879 = vunpack.c.l.b16 %v2712
    %v2880 = vunpack.c.l.b16 %v2713
    %v2881 = vunpack.c.l.b16 %v2714
    %v2882 = vunpack.c.l.b16 %v2715
    %v2883 = vunpack.c.l.b16 %v2716
    %v2884 = vunpack.c.l.b16 %v2717
    %v2885 = vunpack.c.l.b16 %v2718
    %v2886 = vunpack.c.l.b16 %v2719
    %v2887 = vunpack.c.l.b16 %v2720
    %v2888 = vunpack.c.l.b16 %v2721
    %v2889 = vunpack.c.l.b16 %v2722
    %v2890 = vunpack.c.l.b16 %v2723
    %v2891 = vunpack.c.l.b16 %v2724
    %v2892 = vunpack.c.l.b16 %v2725
    %v2893 = vunpack.c.l.b16 %v2726
    %v2894 = vunpack.c.l.b16 %v2727
    %v2895 = vunpack.c.l.b16 %v2728
    %v2896 = vunpack.c.l.b16 %v2729
    %v2897 = vunpack.c.l.b16 %v2730
    %v2898 = vunpack.c.l.b16 %v2731
    %v2899 = vunpack.c.l.b16 %v2732
    %v2900 = vunpack.c.l.b16 %v2733
    %v2901 = vunpack.c.l.b16 %v2734
    %v2902 = vunpack.c.l.b16 %v2735
    %v2903 = vunpack.c.l.b16 %v2736
    %v2904 = vunpack.c.l.b16 %v2737
    %v2905 = vunpack.c.l.b16 %v2738
    %v2906 = vunpack.c.l.b16 %v2739
    %v2907 = vunpack.c.l.b16 %v2740
    %v2908 = vunpack.c.l.b16 %v2741
    %v2909 = vunpack.c.l.b16 %v2742
    %v2910 = vunpack.c.l.b16 %v2743
    %v2911 = vunpack.c.l.b16 %v2744
    %v2912 = vunpack.c.l.b16 %v2745
    %v2913 = vunpack.c.l.b16 %v2746
    %v2914 = vunpack.c.l.b16 %v2747
    %v2915 = vunpack.c.l.b16 %v2748
    %v2916 = vunpack.c.l.b16 %v2749
    %v2917 = vunpack.c.l.b16 %v2750
    %v2918 = vunpack.c.l.b16 %v2751
    %v2919 = vunpack.c.l.b16 %v2752
    %v2920 = vunpack.c.l.b16 %v2753
    %v2921 = vunpack.c.l.b16 %v2754
    %v2922 = vunpack.c.l.b16 %v2755
    %v2923 = vunpack.c.l.b16 %v2756
    %v2924 = vunpack.c.l.b16 %v2757
    %v2925 = vunpack.c.l.b16 %v2758
    %v2926 = vunpack.c.l.b16 %v2759
    %v2927 = vunpack.c.l.b16 %v2760
    %v2928 = vunpack.c.l.b16 %v2761
    %v2929 = vunpack.c.l.b16 %v2762
    %v2930 = vunpack.c.l.b16 %v2763
    %v2931 = vunpack.c.l.b16 %v2764
    %v2932 = vunpack.c.l.b16 %v2765
    %v2933 = vunpack.c.l.b16 %v2766
    %v2934 = vunpack.c.l.b16 %v2767
    %v2935 = vunpack.c.l.b16 %v2768
    %v2936 = vunpack.c.l.b16 %v2769
    %v2937 = vunpack.c.l.b16 %v2770
    %v2938 = vunpack.c.l.b16 %v2771
    %v2939 = vunpack.c.l.b16 %v2772
    %v2940 = vunpack.c.l.b16 %v2773
    %v2941 = vunpack.c.l.b16 %v2774
    %v2942 = vunpack.c.l.b16 %v2775
    %v2943 = vunpack.c.l.b16 %v2776
    %v2944 = vunpack.c.l.b16 %v2777
    %v2945 = vunpack.c.l.b16 %v2778
    %v2946 = vunpack.c.l.b16 %v2779
    %v2947 = vunpack.c.l.b16 %v2780
    %v2948 = vunpack.c.l.b16 %v2781
    %v2949 = vunpack.c.l.b16 %v2782
    %v2950 = vunpack.c.l.b16 %v2783
    %v2951 = vunpack.c.l.b16 %v2784
    %v2952 = vunpack.c.l.b16 %v2785
    %v2953 = vunpack.c.l.b16 %v2786
    %v2954 = vunpack.c.l.b16 %v2787
    %v2955 = vunpack.c.l.b16 %v2788
    %v2956 = vunpack.c.l.b16 %v2789
    %v2957 = vpack.c.b16 %v2878, %v2877
    %v2958 = vpack.c.b16 %v2880, %v2879
    %v2959 = vpack.c.b16 %v2882, %v2881
    %v2960 = vpack.c.b16 %v2884, %v2883
    %v2961 = vpack.c.b16 %v2886, %v2885
    %v2962 = vpack.c.b16 %v2888, %v2887
    %v2963 = vpack.c.b16 %v2890, %v2889
    %v2964 = vpack.c.b16 %v2892, %v2891
    %v2965 = vpack.c.b16 %v2894, %v2893
    %v2966 = vpack.c.b16 %v2896, %v2895
    %v2967 = vpack.c.b16 %v2898, %v2897
    %v2968 = vpack.c.b16 %v2900, %v2899
    %v2969 = vpack.c.b16 %v2902, %v2901
    %v2970 = vpack.c.b16 %v2904, %v2903
    %v2971 = vpack.c.b16 %v2906, %v2905
    %v2972 = vpack.c.b16 %v2908, %v2907
    %v2973 = vpack.c.b16 %v2910, %v2909
    %v2974 = vpack.c.b16 %v2912, %v2911
    %v2975 = vpack.c.b16 %v2914, %v2913
    %v2976 = vpack.c.b16 %v2916, %v2915
    %v2977 = vpack.c.b16 %v2918, %v2917
    %v2978 = vpack.c.b16 %v2920, %v2919
    %v2979 = vpack.c.b16 %v2922, %v2921
    %v2980 = vpack.c.b16 %v2924, %v2923
    %v2981 = vpack.c.b16 %v2926, %v2925
    %v2982 = vpack.c.b16 %v2928, %v2927
    %v2983 = vpack.c.b16 %v2930, %v2929
    %v2984 = vpack.c.b16 %v2932, %v2931
    %v2985 = vpack.c.b16 %v2934, %v2933
    %v2986 = vpack.c.b16 %v2936, %v2935
    %v2987 = vpack.c.b16 %v2938, %v2937
    %v2988 = vpack.c.b16 %v2940, %v2939
    %v2989 = vpack.c.b16 %v2942, %v2941
    %v2990 = vpack.c.b16 %v2944, %v2943
    %v2991 = vpack.c.b16 %v2946, %v2945
    %v2992 = vpack.c.b16 %v2948, %v2947
    %v2993 = vpack.c.b16 %v2950, %v2949
    %v2994 = vpack.c.b16 %v2952, %v2951
    %v2995 = vpack.c.b16 %v2954, %v2953
    %v2996 = vpack.c.b16 %v2956, %v2955
    %3037 = vmatprep.subr.bf16.mxu0 0
    %3038 = vmatpush1.bf16.msra.mxu0 %v2964
    %3039 = vmatprep.subr.bf16.mxu0 0
    %3040 = vmatpush1.bf16.msra.mxu0 %v2963
    %3041 = vmatprep.subr.bf16.mxu0 0
    %3042 = vmatpush1.bf16.msra.mxu0 %v2962
    %3043 = vmatprep.subr.bf16.mxu0 0
    %3044 = vmatpush1.bf16.msra.mxu0 %v2961
    %3045 = vmatprep.subr.bf16.mxu0 0
    %3046 = vmatpush1.bf16.msra.mxu0 %v2960
    %3047 = vmatprep.subr.bf16.mxu0 0
    %3048 = vmatpush1.bf16.msra.mxu0 %v2959
    %3049 = vmatprep.subr.bf16.mxu0 0
    %3050 = vmatpush1.bf16.msra.mxu0 %v2958
    %3051 = vmatprep.subr.bf16.mxu0 0
    %3052 = vmatpush1.bf16.msra.mxu0 %v2957
    %3053 = vmatprep.subr.bf16.mxu0 0
    %3054 = vmatpush2.bf16.msra.mxu0 %v2972
    %3055 = vmatprep.subr.bf16.mxu0 0
    %3056 = vmatpush2.bf16.msra.mxu0 %v2971
    %3057 = vmatprep.subr.bf16.mxu0 0
    %3058 = vmatpush2.bf16.msra.mxu0 %v2970
    %3059 = vmatprep.subr.bf16.mxu0 0
    %3060 = vmatpush2.bf16.msra.mxu0 %v2969
    %3061 = vmatprep.subr.bf16.mxu0 0
    %3062 = vmatpush2.bf16.msra.mxu0 %v2968
    %3063 = vmatprep.subr.bf16.mxu0 0
    %3064 = vmatpush2.bf16.msra.mxu0 %v2967
    %3065 = vmatprep.subr.bf16.mxu0 0
    %3066 = vmatpush2.bf16.msra.mxu0 %v2966
    %3067 = vmatprep.subr.bf16.mxu0 0
    %3068 = vmatpush2.bf16.msra.mxu0 %v2965
    %3069 = vmatprep.mubr.bf16.mxu0 %v2706
    %3070 = vmatmul.mubr.bf16.gmra.mxu0 %v2705
    %v3071 = vpop.f32.mrf.mxu0
    %v3072 = vadd.f32 %v2795, %v3071
    %v3073 = vpop.f32.mrf.mxu0
    %v3074 = vpop.f32.mrf.mxu0
    %v3075 = vpop.f32.mrf.mxu0
    %3076 = vdwg.mxu0
    %3077 = vmatprep.subr.bf16.mxu0 0
    %3078 = vmatpush1.bf16.msra.mxu0 %v2980
    %3079 = vmatprep.subr.bf16.mxu0 0
    %3080 = vmatpush1.bf16.msra.mxu0 %v2979
    %3081 = vmatprep.subr.bf16.mxu0 0
    %3082 = vmatpush1.bf16.msra.mxu0 %v2978
    %3083 = vmatprep.subr.bf16.mxu0 0
    %3084 = vmatpush1.bf16.msra.mxu0 %v2977
    %3085 = vmatprep.subr.bf16.mxu0 0
    %3086 = vmatpush1.bf16.msra.mxu0 %v2976
    %3087 = vmatprep.subr.bf16.mxu0 0
    %3088 = vmatpush1.bf16.msra.mxu0 %v2975
    %3089 = vmatprep.subr.bf16.mxu0 0
    %3090 = vmatpush1.bf16.msra.mxu0 %v2974
    %3091 = vmatprep.subr.bf16.mxu0 0
    %3092 = vmatpush1.bf16.msra.mxu0 %v2973
    %3093 = vmatprep.subr.bf16.mxu0 0
    %3094 = vmatpush2.bf16.msra.mxu0 %v2988
    %3095 = vmatprep.subr.bf16.mxu0 0
    %3096 = vmatpush2.bf16.msra.mxu0 %v2987
    %3097 = vmatprep.subr.bf16.mxu0 0
    %3098 = vmatpush2.bf16.msra.mxu0 %v2986
    %3099 = vmatprep.subr.bf16.mxu0 0
    %3100 = vmatpush2.bf16.msra.mxu0 %v2985
    %3101 = vmatprep.subr.bf16.mxu0 0
    %3102 = vmatpush2.bf16.msra.mxu0 %v2984
    %3103 = vmatprep.subr.bf16.mxu0 0
    %3104 = vmatpush2.bf16.msra.mxu0 %v2983
    %3105 = vmatprep.subr.bf16.mxu0 0
    %3106 = vmatpush2.bf16.msra.mxu0 %v2982
    %3107 = vmatprep.subr.bf16.mxu0 0
    %3108 = vmatpush2.bf16.msra.mxu0 %v2981
    %3109 = vmatprep.mubr.bf16.mxu0 %v2708
    %3110 = vmatmul.mubr.bf16.gmra.mxu0 %v2707
    %v3111 = vpop.f32.mrf.mxu0
    %v3112 = vadd.f32 %v3072, %v3111
    %v3113 = vpop.f32.mrf.mxu0
    %v3114 = vpop.f32.mrf.mxu0
    %v3115 = vpop.f32.mrf.mxu0
    %3116 = vdwg.mxu0
    %3117 = vmatprep.subr.bf16.mxu0 0
    %3118 = vmatpush1.bf16.msra.mxu0 %v2996
    %3119 = vmatprep.subr.bf16.mxu0 0
    %3120 = vmatpush1.bf16.msra.mxu0 %v2995
    %3121 = vmatprep.subr.bf16.mxu0 0
    %3122 = vmatpush1.bf16.msra.mxu0 %v2994
    %3123 = vmatprep.subr.bf16.mxu0 0
    %3124 = vmatpush1.bf16.msra.mxu0 %v2993
    %3125 = vmatprep.subr.bf16.mxu0 0
    %3126 = vmatpush1.bf16.msra.mxu0 %v2992
    %3127 = vmatprep.subr.bf16.mxu0 0
    %3128 = vmatpush1.bf16.msra.mxu0 %v2991
    %3129 = vmatprep.subr.bf16.mxu0 0
    %3130 = vmatpush1.bf16.msra.mxu0 %v2990
    %3131 = vmatprep.subr.bf16.mxu0 0
    %3132 = vmatpush1.bf16.msra.mxu0 %v2989
    %3133 = vmatprep.subr.bf16.mxu0 0
    %3134 = vmatpush2.bf16.msra.mxu0 0
    %3135 = vmatprep.subr.bf16.mxu0 0
    %3136 = vmatpush2.bf16.msra.mxu0 0
    %3137 = vmatprep.subr.bf16.mxu0 0
    %3138 = vmatpush2.bf16.msra.mxu0 0
    %3139 = vmatprep.subr.bf16.mxu0 0
    %3140 = vmatpush2.bf16.msra.mxu0 0
    %3141 = vmatprep.subr.bf16.mxu0 0
    %3142 = vmatpush2.bf16.msra.mxu0 0
    %3143 = vmatprep.subr.bf16.mxu0 0
    %3144 = vmatpush2.bf16.msra.mxu0 0
    %3145 = vmatprep.subr.bf16.mxu0 0
    %3146 = vmatpush2.bf16.msra.mxu0 0
    %3147 = vmatprep.subr.bf16.mxu0 0
    %3148 = vmatpush2.bf16.msra.mxu0 0
    %3149 = vmatprep.mubr.bf16.mxu0 0
    %3150 = vmatmul.mubr.bf16.gmra.mxu0 %v2709
    %v3151 = vpop.f32.mrf.mxu0
    %v3152 = vadd.f32 %v3112, %v3151
    %v3153 = vpop.f32.mrf.mxu0
    %v3154 = vpop.f32.mrf.mxu0
    %v3155 = vpop.f32.mrf.mxu0
    %3156 = vdwg.mxu0
    %v3157 = vtanh.pop %v3152
    %vm3158 = vcmask 15360
    %3159 = vst.msk [vmem:[%s7] sm:$0xff] %vm3158, %v3157
    // Predicated region
    $region50: #{actor_forward.1} parent=1 // pred_check
      _
    $region51: #{actor_forward.1} parent=1 // pred_check_branch
      %3161 = sbr.rel (0) target = $region53
    $region52: #{actor_forward.1} parent=1 // pred_region
      _
    $region53: #{actor_forward.1} parent=1 // pred_fallthru
      _
    // Predicated region
    $region54: #{actor_forward.1} parent=1 // pred_check
      _
    $region55: #{actor_forward.1} parent=1 // pred_check_branch
      %3163 = sbr.rel (0) target = $region57
    $region56: #{actor_forward.1} parent=1 // pred_region
      _
    $region57: #{actor_forward.1} parent=1 // pred_fallthru
      _
    %3164 = vsyncpa [#allocation3], 1
    %3165 = vsyncpa [#allocation5], 1
    %3166 = vsyncpa [#allocation8], 1

</llo_original>
